<compile_context>
chip_gen: v7x
topology: tpu7x:2x2x1
jax: 0.10.0
libtpu: 0.0.40
codegen_flags: <defaults>
</compile_context>

<pallas_src>
import jax
import jax.numpy as jnp
import numpy as np
from jax.experimental import pallas as pl
from jax.experimental.pallas import tpu as pltpu

# ---------------- model configuration (small synthetic shapes) ----------------
N, C_IN, H, W = 2, 4, 16, 16          # input (NCHW, as PyTorch would see it)
C_OUT = 8                             # backbone output channels
NUM_CLASSES = 10                      # head output features
KH = KW = 3                           # conv kernel (stride 1, padding 1)

HP, WP = H + 2, W + 2                 # zero-padded spatial dims (18, 18)
FLAT = HP * WP                        # 324  flattened padded image
FLAT_PAD = 384                        # per-image lane chunk (multiple of 128)
L_OUT = N * FLAT_PAD                  # 768  conv-output lane axis
MAX_SHIFT = (KH - 1) * WP + (KW - 1)  # 38   largest tap shift
LANES_IN = L_OUT + 128                # 896  input lane axis (>= L_OUT + MAX_SHIFT)
K_TAPS = KH * KW                      # 9
NUM_CLASSES_PAD = 128                 # lane-dense padded class dim
P_ROWS = 2 * C_OUT + 1                # 17   packed parameter slab rows


# ------------------------------- Pallas kernel --------------------------------
def full_model_kernel(x_ref, p_ref, pool_ref, o_ref):
    """Whole model in one invocation (no grid, everything resident in VMEM).

    x_ref   : (C_IN, LANES_IN)  zero-padded input; per channel each image is a
              row-major flattened (HP, WP) block in its own FLAT_PAD lane chunk
    p_ref   : (P_ROWS, 128)     packed params:
                rows [0, C_OUT)        cols [0, 36)   conv weight (tap-major, ci fastest)
                rows [0, C_OUT)        col  36        conv bias
                rows [C_OUT, 2*C_OUT)  cols [0, 128)  head weight (C_OUT x padded classes)
                row  2*C_OUT           cols [0, 128)  head bias   (padded classes)
    pool_ref: (N, L_OUT)        averaging matrix: 1/(H*W) at valid (non-padded)
                                output lanes of image n, 0 elsewhere
    o_ref   : (N, 128)          logits (padded classes)
    """
    x = x_ref[...]                                         # (4, 896)
    p = p_ref[...]                                         # (17, 128)
    wc = p[:C_OUT, :K_TAPS * C_IN]                         # (8, 36)
    bc = p[:C_OUT, K_TAPS * C_IN:K_TAPS * C_IN + 1]        # (8, 1)
    wh = p[C_OUT:2 * C_OUT, :]                             # (8, 128)
    bh = p[2 * C_OUT:2 * C_OUT + 1, :]                     # (1, 128)

    # Conv as 9 shifted-tap matmuls accumulated in registers (in-kernel im2col).
    # Output position g = n*FLAT_PAD + r*WP + c corresponds to out pixel (r, c)
    # of image n (valid for r < H, c < W); tap (kh, kw) reads x at g + kh*WP+kw.
    conv = jnp.zeros((C_OUT, L_OUT), jnp.float32)
    for t in range(K_TAPS):
        kh, kw = t // KW, t % KW
        shift = kh * WP + kw                               # static lane shift
        tap = x[:, shift:shift + L_OUT]                    # (4, 768)
        w_t = wc[:, t * C_IN:(t + 1) * C_IN]               # (8, 4)
        conv = conv + jnp.dot(w_t, tap, preferred_element_type=jnp.float32)

    conv = jnp.maximum(conv + bc, 0.0)                     # bias + ReLU, (8, 768)

    # Global average pool: one MXU contraction against the constant averaging
    # matrix (folds the validity mask for padded lanes and the 1/HW scale).
    pooled = jax.lax.dot_general(
        pool_ref[...], conv,
        dimension_numbers=(((1,), (1,)), ((), ())),
        preferred_element_type=jnp.float32)                # (N, C_OUT)

    # Head linear, lane-dense (padded classes).
    logits = jnp.dot(pooled, wh, preferred_element_type=jnp.float32) + bh
    o_ref[...] = logits.astype(o_ref.dtype)


# ------------------------- one-time parameter packing --------------------------
def pack_params(w_conv, b_conv, w_head, b_head):
    """Pack parameters once at init (hoisted out of the per-call jitted path).

    w_conv: (C_OUT, C_IN, KH, KW)  PyTorch OIHW conv weight
    b_conv: (C_OUT,)
    w_head: (NUM_CLASSES, C_OUT)   PyTorch Linear weight (out, in)
    b_head: (NUM_CLASSES,)
    """
    # conv weight, tap-major with ci fastest: col t*C_IN + ci == W[co, ci, kh, kw]
    wc = jnp.transpose(w_conv, (0, 2, 3, 1)).reshape(C_OUT, K_TAPS * C_IN)
    slab = jnp.zeros((P_ROWS, NUM_CLASSES_PAD), jnp.float32)
    slab = slab.at[:C_OUT, :K_TAPS * C_IN].set(wc)
    slab = slab.at[:C_OUT, K_TAPS * C_IN].set(b_conv)
    slab = slab.at[C_OUT:2 * C_OUT, :NUM_CLASSES].set(w_head.T)
    slab = slab.at[2 * C_OUT, :NUM_CLASSES].set(b_head)

    # Constant averaging matrix: 1/(H*W) at valid output lanes of each image.
    pool = np.zeros((N, L_OUT), np.float32)
    for n in range(N):
        for r in range(H):
            base = n * FLAT_PAD + r * WP
            pool[n, base:base + W] = 1.0 / (H * W)
    return slab, jnp.asarray(pool)


# ------------------------------ per-call wrapper --------------------------------
@jax.jit
def full_model(x_nchw, param_slab, pool_mat):
    # Lane-dense flattening of the zero-padded input: one small (C_IN, 896)
    # array (~14 KiB) is the only per-call activation operand fed to the kernel.
    x_pad = jnp.pad(x_nchw, ((0, 0), (0, 0), (1, 1), (1, 1)))         # (N,C,18,18)
    x_flat = x_pad.reshape(N, C_IN, FLAT)                             # (N,C,324)
    x_flat = jnp.pad(x_flat, ((0, 0), (0, 0), (0, FLAT_PAD - FLAT)))  # (N,C,384)
    x_flat = jnp.transpose(x_flat, (1, 0, 2)).reshape(C_IN, L_OUT)    # (C,768)
    x_flat = jnp.pad(x_flat, ((0, 0), (0, LANES_IN - L_OUT)))         # (C,896)

    out_pad = pl.pallas_call(
        full_model_kernel,
        out_shape=jax.ShapeDtypeStruct((N, NUM_CLASSES_PAD), jnp.float32),
        in_specs=[
            pl.BlockSpec(memory_space=pltpu.MemorySpace.VMEM),
            pl.BlockSpec(memory_space=pltpu.MemorySpace.VMEM),
            pl.BlockSpec(memory_space=pltpu.MemorySpace.VMEM),
        ],
        out_specs=pl.BlockSpec(memory_space=pltpu.MemorySpace.VMEM),
    )(x_flat, param_slab, pool_mat)

    return out_pad[:, :NUM_CLASSES]                                   # (N, 10)


# ----------------------------- pure-JAX reference ------------------------------
def full_model_ref(x_nchw, w_conv, b_conv, w_head, b_head):
    y = jax.lax.conv_general_dilated(
        x_nchw, w_conv, window_strides=(1, 1), padding=((1, 1), (1, 1)),
        dimension_numbers=("NCHW", "OIHW", "NCHW"),
    ) + b_conv.reshape(1, C_OUT, 1, 1)
    y = jnp.maximum(y, 0.0)                                  # ReLU
    pooled = jnp.mean(y, axis=(2, 3))                        # (N, C_OUT)
    return pooled @ w_head.T + b_head                        # (N, NUM_CLASSES)


# ----------------------------------- main ---------------------------------------
if __name__ == "__main__":
    key = jax.random.PRNGKey(0)
    k_x, k_wc, k_bc, k_wh, k_bh = jax.random.split(key, 5)

    x = jax.random.normal(k_x, (N, C_IN, H, W), dtype=jnp.float32)
    w_conv = jax.random.normal(k_wc, (C_OUT, C_IN, KH, KW), jnp.float32) * 0.1
    b_conv = jax.random.normal(k_bc, (C_OUT,), jnp.float32) * 0.1
    w_head = jax.random.normal(k_wh, (NUM_CLASSES, C_OUT), jnp.float32) * 0.1
    b_head = jax.random.normal(k_bh, (NUM_CLASSES,), jnp.float32) * 0.1

    # One-time packing (hoisted out of the per-call path).
    param_slab, pool_mat = pack_params(w_conv, b_conv, w_head, b_head)
    param_slab, pool_mat = jax.block_until_ready((param_slab, pool_mat))

    out = full_model(x, param_slab, pool_mat)
    out = jax.block_until_ready(out)

    ref = full_model_ref(x, w_conv, b_conv, w_head, b_head)
    assert out.shape == (N, NUM_CLASSES)
    assert jnp.allclose(out, ref, atol=1e-4, rtol=1e-4), "mismatch vs reference"

    print("KERNEL_OK")
</pallas_src>

<mosaic_0001>
module attributes {stable_mosaic.version = 11 : i64} {
  func.func @full_model_kernel(%arg0: memref<4x896xf32, #tpu.memory_space<vmem>>, %arg1: memref<17x128xf32, #tpu.memory_space<vmem>>, %arg2: memref<2x768xf32, #tpu.memory_space<vmem>>, %arg3: memref<2x128xf32, #tpu.memory_space<vmem>>) attributes {dimension_semantics = [], scalar_prefetch = 0 : i64, scratch_operands = 0 : i64, tpu.core_type = #tpu.core_type<tc>} {
    %c0 = arith.constant 0 : index
    %c0_0 = arith.constant 0 : index
    %0 = vector.load %arg0[%c0, %c0_0] : memref<4x896xf32, #tpu.memory_space<vmem>>, vector<4x896xf32>
    %c0_1 = arith.constant 0 : index
    %c0_2 = arith.constant 0 : index
    %1 = vector.load %arg1[%c0_1, %c0_2] : memref<17x128xf32, #tpu.memory_space<vmem>>, vector<17x128xf32>
    %2 = vector.extract_strided_slice %1 {offsets = [0, 0], sizes = [8, 36], strides = [1, 1]} : vector<17x128xf32> to vector<8x36xf32>
    %3 = vector.extract_strided_slice %1 {offsets = [0, 36], sizes = [8, 1], strides = [1, 1]} : vector<17x128xf32> to vector<8x1xf32>
    %4 = vector.extract_strided_slice %1 {offsets = [8, 0], sizes = [8, 128], strides = [1, 1]} : vector<17x128xf32> to vector<8x128xf32>
    %5 = vector.extract_strided_slice %1 {offsets = [16, 0], sizes = [1, 128], strides = [1, 1]} : vector<17x128xf32> to vector<1x128xf32>
    %cst = arith.constant 0.000000e+00 : f32
    %6 = vector.broadcast %cst : f32 to vector<8x768xf32>
    %7 = vector.extract_strided_slice %0 {offsets = [0, 0], sizes = [4, 768], strides = [1, 1]} : vector<4x896xf32> to vector<4x768xf32>
    %8 = vector.extract_strided_slice %2 {offsets = [0, 0], sizes = [8, 4], strides = [1, 1]} : vector<8x36xf32> to vector<8x4xf32>
    %cst_3 = arith.constant dense<0.000000e+00> : vector<8x768xf32>
    %9 = tpu.matmul %8, %7, %cst_3 {dimension_numbers = #tpu.dot_dimension_numbers<[1], [0], [0], [1], [0, 0, 1, 1], [], []>} : vector<8x4xf32>, vector<4x768xf32>, vector<8x768xf32> -> vector<8x768xf32>
    %10 = arith.addf %6, %9 : vector<8x768xf32>
    %11 = vector.extract_strided_slice %0 {offsets = [0, 1], sizes = [4, 768], strides = [1, 1]} : vector<4x896xf32> to vector<4x768xf32>
    %12 = vector.extract_strided_slice %2 {offsets = [0, 4], sizes = [8, 4], strides = [1, 1]} : vector<8x36xf32> to vector<8x4xf32>
    %cst_4 = arith.constant dense<0.000000e+00> : vector<8x768xf32>
    %13 = tpu.matmul %12, %11, %cst_4 {dimension_numbers = #tpu.dot_dimension_numbers<[1], [0], [0], [1], [0, 0, 1, 1], [], []>} : vector<8x4xf32>, vector<4x768xf32>, vector<8x768xf32> -> vector<8x768xf32>
    %14 = arith.addf %10, %13 : vector<8x768xf32>
    %15 = vector.extract_strided_slice %0 {offsets = [0, 2], sizes = [4, 768], strides = [1, 1]} : vector<4x896xf32> to vector<4x768xf32>
    %16 = vector.extract_strided_slice %2 {offsets = [0, 8], sizes = [8, 4], strides = [1, 1]} : vector<8x36xf32> to vector<8x4xf32>
    %cst_5 = arith.constant dense<0.000000e+00> : vector<8x768xf32>
    %17 = tpu.matmul %16, %15, %cst_5 {dimension_numbers = #tpu.dot_dimension_numbers<[1], [0], [0], [1], [0, 0, 1, 1], [], []>} : vector<8x4xf32>, vector<4x768xf32>, vector<8x768xf32> -> vector<8x768xf32>
    %18 = arith.addf %14, %17 : vector<8x768xf32>
    %19 = vector.extract_strided_slice %0 {offsets = [0, 18], sizes = [4, 768], strides = [1, 1]} : vector<4x896xf32> to vector<4x768xf32>
    %20 = vector.extract_strided_slice %2 {offsets = [0, 12], sizes = [8, 4], strides = [1, 1]} : vector<8x36xf32> to vector<8x4xf32>
    %cst_6 = arith.constant dense<0.000000e+00> : vector<8x768xf32>
    %21 = tpu.matmul %20, %19, %cst_6 {dimension_numbers = #tpu.dot_dimension_numbers<[1], [0], [0], [1], [0, 0, 1, 1], [], []>} : vector<8x4xf32>, vector<4x768xf32>, vector<8x768xf32> -> vector<8x768xf32>
    %22 = arith.addf %18, %21 : vector<8x768xf32>
    %23 = vector.extract_strided_slice %0 {offsets = [0, 19], sizes = [4, 768], strides = [1, 1]} : vector<4x896xf32> to vector<4x768xf32>
    %24 = vector.extract_strided_slice %2 {offsets = [0, 16], sizes = [8, 4], strides = [1, 1]} : vector<8x36xf32> to vector<8x4xf32>
    %cst_7 = arith.constant dense<0.000000e+00> : vector<8x768xf32>
    %25 = tpu.matmul %24, %23, %cst_7 {dimension_numbers = #tpu.dot_dimension_numbers<[1], [0], [0], [1], [0, 0, 1, 1], [], []>} : vector<8x4xf32>, vector<4x768xf32>, vector<8x768xf32> -> vector<8x768xf32>
    %26 = arith.addf %22, %25 : vector<8x768xf32>
    %27 = vector.extract_strided_slice %0 {offsets = [0, 20], sizes = [4, 768], strides = [1, 1]} : vector<4x896xf32> to vector<4x768xf32>
    %28 = vector.extract_strided_slice %2 {offsets = [0, 20], sizes = [8, 4], strides = [1, 1]} : vector<8x36xf32> to vector<8x4xf32>
    %cst_8 = arith.constant dense<0.000000e+00> : vector<8x768xf32>
    %29 = tpu.matmul %28, %27, %cst_8 {dimension_numbers = #tpu.dot_dimension_numbers<[1], [0], [0], [1], [0, 0, 1, 1], [], []>} : vector<8x4xf32>, vector<4x768xf32>, vector<8x768xf32> -> vector<8x768xf32>
    %30 = arith.addf %26, %29 : vector<8x768xf32>
    %31 = vector.extract_strided_slice %0 {offsets = [0, 36], sizes = [4, 768], strides = [1, 1]} : vector<4x896xf32> to vector<4x768xf32>
    %32 = vector.extract_strided_slice %2 {offsets = [0, 24], sizes = [8, 4], strides = [1, 1]} : vector<8x36xf32> to vector<8x4xf32>
    %cst_9 = arith.constant dense<0.000000e+00> : vector<8x768xf32>
    %33 = tpu.matmul %32, %31, %cst_9 {dimension_numbers = #tpu.dot_dimension_numbers<[1], [0], [0], [1], [0, 0, 1, 1], [], []>} : vector<8x4xf32>, vector<4x768xf32>, vector<8x768xf32> -> vector<8x768xf32>
    %34 = arith.addf %30, %33 : vector<8x768xf32>
    %35 = vector.extract_strided_slice %0 {offsets = [0, 37], sizes = [4, 768], strides = [1, 1]} : vector<4x896xf32> to vector<4x768xf32>
    %36 = vector.extract_strided_slice %2 {offsets = [0, 28], sizes = [8, 4], strides = [1, 1]} : vector<8x36xf32> to vector<8x4xf32>
    %cst_10 = arith.constant dense<0.000000e+00> : vector<8x768xf32>
    %37 = tpu.matmul %36, %35, %cst_10 {dimension_numbers = #tpu.dot_dimension_numbers<[1], [0], [0], [1], [0, 0, 1, 1], [], []>} : vector<8x4xf32>, vector<4x768xf32>, vector<8x768xf32> -> vector<8x768xf32>
    %38 = arith.addf %34, %37 : vector<8x768xf32>
    %39 = vector.extract_strided_slice %0 {offsets = [0, 38], sizes = [4, 768], strides = [1, 1]} : vector<4x896xf32> to vector<4x768xf32>
    %40 = vector.extract_strided_slice %2 {offsets = [0, 32], sizes = [8, 4], strides = [1, 1]} : vector<8x36xf32> to vector<8x4xf32>
    %cst_11 = arith.constant dense<0.000000e+00> : vector<8x768xf32>
    %41 = tpu.matmul %40, %39, %cst_11 {dimension_numbers = #tpu.dot_dimension_numbers<[1], [0], [0], [1], [0, 0, 1, 1], [], []>} : vector<8x4xf32>, vector<4x768xf32>, vector<8x768xf32> -> vector<8x768xf32>
    %42 = arith.addf %38, %41 : vector<8x768xf32>
    %43 = vector.broadcast %3 : vector<8x1xf32> to vector<8x768xf32>
    %44 = arith.addf %42, %43 : vector<8x768xf32>
    %cst_12 = arith.constant 0.000000e+00 : f32
    %45 = vector.broadcast %cst_12 : f32 to vector<8x768xf32>
    %46 = arith.maximumf %44, %45 : vector<8x768xf32>
    %c0_13 = arith.constant 0 : index
    %c0_14 = arith.constant 0 : index
    %47 = vector.load %arg2[%c0_13, %c0_14] : memref<2x768xf32, #tpu.memory_space<vmem>>, vector<2x768xf32>
    %cst_15 = arith.constant dense<0.000000e+00> : vector<2x8xf32>
    %48 = tpu.matmul %47, %46, %cst_15 {dimension_numbers = #tpu.dot_dimension_numbers<[1], [1], [0], [0], [0, 0, 1, 0], [], []>} : vector<2x768xf32>, vector<8x768xf32>, vector<2x8xf32> -> vector<2x8xf32>
    %cst_16 = arith.constant dense<0.000000e+00> : vector<2x128xf32>
    %49 = tpu.matmul %48, %4, %cst_16 {dimension_numbers = #tpu.dot_dimension_numbers<[1], [0], [0], [1], [0, 0, 1, 1], [], []>} : vector<2x8xf32>, vector<8x128xf32>, vector<2x128xf32> -> vector<2x128xf32>
    %50 = vector.broadcast %5 : vector<1x128xf32> to vector<2x128xf32>
    %51 = arith.addf %49, %50 : vector<2x128xf32>
    %c0_17 = arith.constant 0 : index
    %c0_18 = arith.constant 0 : index
    %52 = vector.load %arg3[%c0_17, %c0_18] : memref<2x128xf32, #tpu.memory_space<vmem>>, vector<2x128xf32>
    tpu.vector_store %arg3[%c0_17, %c0_18], %51 {strides = array<i32>} : memref<2x128xf32, #tpu.memory_space<vmem>>, vector<2x128xf32>,
    return
  }
}

</mosaic_0001>

<llo_original>
// kernel: full_model.1
$region0: #{full_model.1}
  #allocation0 [shape = 'u32[]', space=smem, size = 0x4, offset = 0x4, fixed_abs, tag = 'smem constant byte address 0x4 - core index']
  #allocation1 [shape = 'u32[144,128]{1,0:T(1,128)}', space=vmem, size = 0x12000, scoped, tag = 'internal scratch']
  %s0 = inlined_call_operand.vmem [shape: f32[4,896], index: 0, kind: input, shape index: {}]
  %s1 = inlined_call_operand.vmem [shape: f32[17,128], index: 1, kind: input, shape index: {}]
  %s2 = inlined_call_operand.vmem [shape: f32[2,768], index: 2, kind: input, shape index: {}]
  %s3 = inlined_call_operand.hbm [shape: f32[2,128], index: 3, kind: output, shape index: {}]
  %s4 = sld [smem:[#allocation0]]
  $region22: #{full_model.1} parent=0
    _
  %s6 = ssub.s32 1, %s4
  %s7 = scalar_select 0, %s6, %s4
  $region1: #{full_model.1} parent=0
    #allocation2 [shape = 'u8[1024]{0}', space=vmem, size = 0x400, scoped, tag = 'output window, operand 0, single buffered']
    #allocation3 [shape = 's32[1]{0}', space=sflag, size = 0x4, scoped, tag = 'scoped memory for full_model.1']
    %8 = vsyncpa [#allocation3], 0
    // Predicated region
    $region2: #{full_model.1} parent=1 // pred_check
      _
    $region3: #{full_model.1} parent=1 // pred_check_branch
      %10 = sbr.rel (0) target = $region5
    $region4: #{full_model.1} parent=1 // pred_region
      _
    $region5: #{full_model.1} parent=1 // pred_fallthru
      _
    // Predicated region
    $region6: #{full_model.1} parent=1 // pred_check
      _
    $region7: #{full_model.1} parent=1 // pred_check_branch
      %12 = sbr.rel (0) target = $region9
    $region8: #{full_model.1} parent=1 // pred_region
      _
    $region9: #{full_model.1} parent=1 // pred_fallthru
      _
    // Predicated region
    $region10: #{full_model.1} parent=1 // pred_check
      _
    $region11: #{full_model.1} parent=1 // pred_check_branch
      %14 = sbr.rel (0) target = $region13
    $region12: #{full_model.1} parent=1 // pred_region
      _
    $region13: #{full_model.1} parent=1 // pred_fallthru
      _
    %v15 = vld [vmem:[%s0] sm:$0xff]
    %v16 = vld [vmem:[%s0 + $0x8] sm:$0xff]
    %v17 = vld [vmem:[%s0 + $0x10] sm:$0xff]
    %v18 = vld [vmem:[%s0 + $0x18] sm:$0xf]
    %v19 = vld [vmem:[%s1] sm:$0xff]
    %v20 = vld [vmem:[%s1 + $0x8] sm:$0xff]
    %v21 = vld [vmem:[%s1 + $0x10] sm:$0x1]
    %23 = vrot.lane.b32.xlu0 %v19, 124
    %v24 = vpop.permute.xlu0 %23
    %v29 = vcombine.high %v15, %v15
    %v30 = vcombine.high %v16, %v16
    %v31 = vcombine.high %v17, %v17
    %32 = vrot.lane.b32.xlu0 %v15, 127
    %v33 = vpop.permute.xlu0 %32
    %34 = vrot.lane.b32.xlu0 %v29, 127
    %v35 = vpop.permute.xlu0 %34
    %36 = vrot.lane.b32.xlu0 %v16, 127
    %v37 = vpop.permute.xlu0 %36
    %38 = vrot.lane.b32.xlu0 %v30, 127
    %v39 = vpop.permute.xlu0 %38
    %40 = vrot.lane.b32.xlu0 %v17, 127
    %v41 = vpop.permute.xlu0 %40
    %42 = vrot.lane.b32.xlu0 %v31, 127
    %v43 = vpop.permute.xlu0 %42
    %44 = vrot.lane.b32.xlu0 %v18, 127
    %v45 = vpop.permute.xlu0 %44
    %vm46 = vcmask 1039360
    %v47 = vsel %vm46, %v33, %v35
    %v48 = vsel %vm46, %v35, %v37
    %v49 = vsel %vm46, %v37, %v39
    %v50 = vsel %vm46, %v39, %v41
    %v51 = vsel %vm46, %v41, %v43
    %v52 = vsel %vm46, %v43, %v45
    %vm53 = vcmask 31744
    %v54 = vsel %vm53, %v24, 0
    %vm56 = vcmask 1043456
    %v57 = vsel %vm56, %v47, 0
    %v59 = vsel %vm56, %v48, 0
    %v61 = vsel %vm56, %v49, 0
    %v63 = vsel %vm56, %v50, 0
    %v65 = vsel %vm56, %v51, 0
    %v67 = vsel %vm56, %v52, 0
    %69 = vmatprep.subr.mxu0 %v59
    %70 = vmatpush1.msra.mxu0 %v57
    %71 = vmatprep.subr.mxu0 0.0
    %72 = vmatpush1.msra.mxu0 0.0
    %73 = vmatprep.subr.mxu0 0.0
    %74 = vmatpush1.msra.mxu0 0.0
    %75 = vmatprep.subr.mxu0 0.0
    %76 = vmatpush1.msra.mxu0 0.0
    %77 = vmatprep.subr.mxu0 0.0
    %78 = vmatpush1.msra.mxu0 0.0
    %79 = vmatprep.subr.mxu0 0.0
    %80 = vmatpush1.msra.mxu0 0.0
    %81 = vmatprep.subr.mxu0 0.0
    %82 = vmatpush1.msra.mxu0 0.0
    %83 = vmatprep.subr.mxu0 0.0
    %84 = vmatpush1.msra.mxu0 0.0
    %85 = vmatprep.subr.mxu0 0.0
    %86 = vmatpush1.msra.mxu0 0.0
    %87 = vmatprep.subr.mxu0 0.0
    %88 = vmatpush1.msra.mxu0 0.0
    %89 = vmatprep.subr.mxu0 0.0
    %90 = vmatpush1.msra.mxu0 0.0
    %91 = vmatprep.subr.mxu0 0.0
    %92 = vmatpush1.msra.mxu0 0.0
    %93 = vmatprep.subr.mxu0 0.0
    %94 = vmatpush1.msra.mxu0 0.0
    %95 = vmatprep.subr.mxu0 0.0
    %96 = vmatpush1.msra.mxu0 0.0
    %97 = vmatprep.subr.mxu0 0.0
    %98 = vmatpush1.msra.mxu0 0.0
    %99 = vmatprep.subr.mxu0 0.0
    %100 = vmatpush1.msra.mxu0 0.0
    %101 = vmatprep.subr.mxu0 0.0
    %102 = vmatpush1.msra.mxu0 0.0
    %103 = vmatprep.subr.mxu0 0.0
    %104 = vmatpush1.msra.mxu0 0.0
    %105 = vmatprep.subr.mxu0 0.0
    %106 = vmatpush1.msra.mxu0 0.0
    %107 = vmatprep.subr.mxu0 0.0
    %108 = vmatpush1.msra.mxu0 0.0
    %109 = vmatprep.subr.mxu0 0.0
    %110 = vmatpush1.msra.mxu0 0.0
    %111 = vmatprep.subr.mxu0 0.0
    %112 = vmatpush1.msra.mxu0 0.0
    %113 = vmatprep.subr.mxu0 0.0
    %114 = vmatpush1.msra.mxu0 0.0
    %115 = vmatprep.subr.mxu0 0.0
    %116 = vmatpush1.msra.mxu0 0.0
    %117 = vmatprep.subr.mxu0 0.0
    %118 = vmatpush1.msra.mxu0 0.0
    %119 = vmatprep.subr.mxu0 0.0
    %120 = vmatpush1.msra.mxu0 0.0
    %121 = vmatprep.subr.mxu0 0.0
    %122 = vmatpush1.msra.mxu0 0.0
    %123 = vmatprep.subr.mxu0 0.0
    %124 = vmatpush1.msra.mxu0 0.0
    %125 = vmatprep.subr.mxu0 0.0
    %126 = vmatpush1.msra.mxu0 0.0
    %127 = vmatprep.subr.mxu0 0.0
    %128 = vmatpush1.msra.mxu0 0.0
    %129 = vmatprep.subr.mxu0 0.0
    %130 = vmatpush1.msra.mxu0 0.0
    %131 = vmatprep.subr.mxu0 0.0
    %132 = vmatpush1.msra.mxu0 0.0
    %133 = vmatprep.mubr.f32.mxu0 0.0
    %134 = vmatmul.mubr.f32.gmra.mrb[0].mxu0 %v54
    %v135 = vpop.f32.mrb[0].mxu0
    %v136 = vadd.f32 0.0, %v135
    %v137 = vpop.f32.mrb[0].mxu0
    %v138 = vadd.f32 0.0, %v137
    %139 = vdwg.mxu0
    %140 = vmatprep.subr.mxu0 %v63
    %141 = vmatpush1.msra.mxu0 %v61
    %142 = vmatprep.subr.mxu0 0.0
    %143 = vmatpush1.msra.mxu0 0.0
    %144 = vmatprep.subr.mxu0 0.0
    %145 = vmatpush1.msra.mxu0 0.0
    %146 = vmatprep.subr.mxu0 0.0
    %147 = vmatpush1.msra.mxu0 0.0
    %148 = vmatprep.subr.mxu0 0.0
    %149 = vmatpush1.msra.mxu0 0.0
    %150 = vmatprep.subr.mxu0 0.0
    %151 = vmatpush1.msra.mxu0 0.0
    %152 = vmatprep.subr.mxu0 0.0
    %153 = vmatpush1.msra.mxu0 0.0
    %154 = vmatprep.subr.mxu0 0.0
    %155 = vmatpush1.msra.mxu0 0.0
    %156 = vmatprep.subr.mxu0 0.0
    %157 = vmatpush1.msra.mxu0 0.0
    %158 = vmatprep.subr.mxu0 0.0
    %159 = vmatpush1.msra.mxu0 0.0
    %160 = vmatprep.subr.mxu0 0.0
    %161 = vmatpush1.msra.mxu0 0.0
    %162 = vmatprep.subr.mxu0 0.0
    %163 = vmatpush1.msra.mxu0 0.0
    %164 = vmatprep.subr.mxu0 0.0
    %165 = vmatpush1.msra.mxu0 0.0
    %166 = vmatprep.subr.mxu0 0.0
    %167 = vmatpush1.msra.mxu0 0.0
    %168 = vmatprep.subr.mxu0 0.0
    %169 = vmatpush1.msra.mxu0 0.0
    %170 = vmatprep.subr.mxu0 0.0
    %171 = vmatpush1.msra.mxu0 0.0
    %172 = vmatprep.subr.mxu0 0.0
    %173 = vmatpush1.msra.mxu0 0.0
    %174 = vmatprep.subr.mxu0 0.0
    %175 = vmatpush1.msra.mxu0 0.0
    %176 = vmatprep.subr.mxu0 0.0
    %177 = vmatpush1.msra.mxu0 0.0
    %178 = vmatprep.subr.mxu0 0.0
    %179 = vmatpush1.msra.mxu0 0.0
    %180 = vmatprep.subr.mxu0 0.0
    %181 = vmatpush1.msra.mxu0 0.0
    %182 = vmatprep.subr.mxu0 0.0
    %183 = vmatpush1.msra.mxu0 0.0
    %184 = vmatprep.subr.mxu0 0.0
    %185 = vmatpush1.msra.mxu0 0.0
    %186 = vmatprep.subr.mxu0 0.0
    %187 = vmatpush1.msra.mxu0 0.0
    %188 = vmatprep.subr.mxu0 0.0
    %189 = vmatpush1.msra.mxu0 0.0
    %190 = vmatprep.subr.mxu0 0.0
    %191 = vmatpush1.msra.mxu0 0.0
    %192 = vmatprep.subr.mxu0 0.0
    %193 = vmatpush1.msra.mxu0 0.0
    %194 = vmatprep.subr.mxu0 0.0
    %195 = vmatpush1.msra.mxu0 0.0
    %196 = vmatprep.subr.mxu0 0.0
    %197 = vmatpush1.msra.mxu0 0.0
    %198 = vmatprep.subr.mxu0 0.0
    %199 = vmatpush1.msra.mxu0 0.0
    %200 = vmatprep.subr.mxu0 0.0
    %201 = vmatpush1.msra.mxu0 0.0
    %202 = vmatprep.subr.mxu0 0.0
    %203 = vmatpush1.msra.mxu0 0.0
    %204 = vmatprep.mubr.f32.mxu0 0.0
    %205 = vmatmul.mubr.f32.gmra.mrb[0].mxu0 %v54
    %v206 = vpop.f32.mrb[0].mxu0
    %v207 = vadd.f32 0.0, %v206
    %v208 = vpop.f32.mrb[0].mxu0
    %v209 = vadd.f32 0.0, %v208
    %210 = vdwg.mxu0
    %211 = vmatprep.subr.mxu0 %v67
    %212 = vmatpush1.msra.mxu0 %v65
    %213 = vmatprep.subr.mxu0 0.0
    %214 = vmatpush1.msra.mxu0 0.0
    %215 = vmatprep.subr.mxu0 0.0
    %216 = vmatpush1.msra.mxu0 0.0
    %217 = vmatprep.subr.mxu0 0.0
    %218 = vmatpush1.msra.mxu0 0.0
    %219 = vmatprep.subr.mxu0 0.0
    %220 = vmatpush1.msra.mxu0 0.0
    %221 = vmatprep.subr.mxu0 0.0
    %222 = vmatpush1.msra.mxu0 0.0
    %223 = vmatprep.subr.mxu0 0.0
    %224 = vmatpush1.msra.mxu0 0.0
    %225 = vmatprep.subr.mxu0 0.0
    %226 = vmatpush1.msra.mxu0 0.0
    %227 = vmatprep.subr.mxu0 0.0
    %228 = vmatpush1.msra.mxu0 0.0
    %229 = vmatprep.subr.mxu0 0.0
    %230 = vmatpush1.msra.mxu0 0.0
    %231 = vmatprep.subr.mxu0 0.0
    %232 = vmatpush1.msra.mxu0 0.0
    %233 = vmatprep.subr.mxu0 0.0
    %234 = vmatpush1.msra.mxu0 0.0
    %235 = vmatprep.subr.mxu0 0.0
    %236 = vmatpush1.msra.mxu0 0.0
    %237 = vmatprep.subr.mxu0 0.0
    %238 = vmatpush1.msra.mxu0 0.0
    %239 = vmatprep.subr.mxu0 0.0
    %240 = vmatpush1.msra.mxu0 0.0
    %241 = vmatprep.subr.mxu0 0.0
    %242 = vmatpush1.msra.mxu0 0.0
    %243 = vmatprep.subr.mxu0 0.0
    %244 = vmatpush1.msra.mxu0 0.0
    %245 = vmatprep.subr.mxu0 0.0
    %246 = vmatpush1.msra.mxu0 0.0
    %247 = vmatprep.subr.mxu0 0.0
    %248 = vmatpush1.msra.mxu0 0.0
    %249 = vmatprep.subr.mxu0 0.0
    %250 = vmatpush1.msra.mxu0 0.0
    %251 = vmatprep.subr.mxu0 0.0
    %252 = vmatpush1.msra.mxu0 0.0
    %253 = vmatprep.subr.mxu0 0.0
    %254 = vmatpush1.msra.mxu0 0.0
    %255 = vmatprep.subr.mxu0 0.0
    %256 = vmatpush1.msra.mxu0 0.0
    %257 = vmatprep.subr.mxu0 0.0
    %258 = vmatpush1.msra.mxu0 0.0
    %259 = vmatprep.subr.mxu0 0.0
    %260 = vmatpush1.msra.mxu0 0.0
    %261 = vmatprep.subr.mxu0 0.0
    %262 = vmatpush1.msra.mxu0 0.0
    %263 = vmatprep.subr.mxu0 0.0
    %264 = vmatpush1.msra.mxu0 0.0
    %265 = vmatprep.subr.mxu0 0.0
    %266 = vmatpush1.msra.mxu0 0.0
    %267 = vmatprep.subr.mxu0 0.0
    %268 = vmatpush1.msra.mxu0 0.0
    %269 = vmatprep.subr.mxu0 0.0
    %270 = vmatpush1.msra.mxu0 0.0
    %271 = vmatprep.subr.mxu0 0.0
    %272 = vmatpush1.msra.mxu0 0.0
    %273 = vmatprep.subr.mxu0 0.0
    %274 = vmatpush1.msra.mxu0 0.0
    %275 = vmatprep.mubr.f32.mxu0 0.0
    %276 = vmatmul.mubr.f32.gmra.mrb[0].mxu0 %v54
    %v277 = vpop.f32.mrb[0].mxu0
    %v278 = vadd.f32 0.0, %v277
    %v279 = vpop.f32.mrb[0].mxu0
    %v280 = vadd.f32 0.0, %v279
    %281 = vdwg.mxu0
    %v282 = vsel %vm53, %v19, 0
    %v284 = vsel %vm56, %v15, 0
    %v286 = vsel %vm56, %v29, 0
    %v288 = vsel %vm56, %v16, 0
    %v290 = vsel %vm56, %v30, 0
    %v292 = vsel %vm56, %v17, 0
    %v294 = vsel %vm56, %v31, 0
    %296 = vmatprep.subr.mxu0 %v286
    %297 = vmatpush1.msra.mxu0 %v284
    %298 = vmatprep.subr.mxu0 0.0
    %299 = vmatpush1.msra.mxu0 0.0
    %300 = vmatprep.subr.mxu0 0.0
    %301 = vmatpush1.msra.mxu0 0.0
    %302 = vmatprep.subr.mxu0 0.0
    %303 = vmatpush1.msra.mxu0 0.0
    %304 = vmatprep.subr.mxu0 0.0
    %305 = vmatpush1.msra.mxu0 0.0
    %306 = vmatprep.subr.mxu0 0.0
    %307 = vmatpush1.msra.mxu0 0.0
    %308 = vmatprep.subr.mxu0 0.0
    %309 = vmatpush1.msra.mxu0 0.0
    %310 = vmatprep.subr.mxu0 0.0
    %311 = vmatpush1.msra.mxu0 0.0
    %312 = vmatprep.subr.mxu0 0.0
    %313 = vmatpush1.msra.mxu0 0.0
    %314 = vmatprep.subr.mxu0 0.0
    %315 = vmatpush1.msra.mxu0 0.0
    %316 = vmatprep.subr.mxu0 0.0
    %317 = vmatpush1.msra.mxu0 0.0
    %318 = vmatprep.subr.mxu0 0.0
    %319 = vmatpush1.msra.mxu0 0.0
    %320 = vmatprep.subr.mxu0 0.0
    %321 = vmatpush1.msra.mxu0 0.0
    %322 = vmatprep.subr.mxu0 0.0
    %323 = vmatpush1.msra.mxu0 0.0
    %324 = vmatprep.subr.mxu0 0.0
    %325 = vmatpush1.msra.mxu0 0.0
    %326 = vmatprep.subr.mxu0 0.0
    %327 = vmatpush1.msra.mxu0 0.0
    %328 = vmatprep.subr.mxu0 0.0
    %329 = vmatpush1.msra.mxu0 0.0
    %330 = vmatprep.subr.mxu0 0.0
    %331 = vmatpush1.msra.mxu0 0.0
    %332 = vmatprep.subr.mxu0 0.0
    %333 = vmatpush1.msra.mxu0 0.0
    %334 = vmatprep.subr.mxu0 0.0
    %335 = vmatpush1.msra.mxu0 0.0
    %336 = vmatprep.subr.mxu0 0.0
    %337 = vmatpush1.msra.mxu0 0.0
    %338 = vmatprep.subr.mxu0 0.0
    %339 = vmatpush1.msra.mxu0 0.0
    %340 = vmatprep.subr.mxu0 0.0
    %341 = vmatpush1.msra.mxu0 0.0
    %342 = vmatprep.subr.mxu0 0.0
    %343 = vmatpush1.msra.mxu0 0.0
    %344 = vmatprep.subr.mxu0 0.0
    %345 = vmatpush1.msra.mxu0 0.0
    %346 = vmatprep.subr.mxu0 0.0
    %347 = vmatpush1.msra.mxu0 0.0
    %348 = vmatprep.subr.mxu0 0.0
    %349 = vmatpush1.msra.mxu0 0.0
    %350 = vmatprep.subr.mxu0 0.0
    %351 = vmatpush1.msra.mxu0 0.0
    %352 = vmatprep.subr.mxu0 0.0
    %353 = vmatpush1.msra.mxu0 0.0
    %354 = vmatprep.subr.mxu0 0.0
    %355 = vmatpush1.msra.mxu0 0.0
    %356 = vmatprep.subr.mxu0 0.0
    %357 = vmatpush1.msra.mxu0 0.0
    %358 = vmatprep.subr.mxu0 0.0
    %359 = vmatpush1.msra.mxu0 0.0
    %360 = vmatprep.mubr.f32.mxu0 0.0
    %361 = vmatmul.mubr.f32.gmra.mrb[0].mxu0 %v282
    %v362 = vpop.f32.mrb[0].mxu0
    %v363 = vadd.f32 %v136, %v362
    %v364 = vpop.f32.mrb[0].mxu0
    %v365 = vadd.f32 %v138, %v364
    %366 = vdwg.mxu0
    %367 = vmatprep.subr.mxu0 %v290
    %368 = vmatpush1.msra.mxu0 %v288
    %369 = vmatprep.subr.mxu0 0.0
    %370 = vmatpush1.msra.mxu0 0.0
    %371 = vmatprep.subr.mxu0 0.0
    %372 = vmatpush1.msra.mxu0 0.0
    %373 = vmatprep.subr.mxu0 0.0
    %374 = vmatpush1.msra.mxu0 0.0
    %375 = vmatprep.subr.mxu0 0.0
    %376 = vmatpush1.msra.mxu0 0.0
    %377 = vmatprep.subr.mxu0 0.0
    %378 = vmatpush1.msra.mxu0 0.0
    %379 = vmatprep.subr.mxu0 0.0
    %380 = vmatpush1.msra.mxu0 0.0
    %381 = vmatprep.subr.mxu0 0.0
    %382 = vmatpush1.msra.mxu0 0.0
    %383 = vmatprep.subr.mxu0 0.0
    %384 = vmatpush1.msra.mxu0 0.0
    %385 = vmatprep.subr.mxu0 0.0
    %386 = vmatpush1.msra.mxu0 0.0
    %387 = vmatprep.subr.mxu0 0.0
    %388 = vmatpush1.msra.mxu0 0.0
    %389 = vmatprep.subr.mxu0 0.0
    %390 = vmatpush1.msra.mxu0 0.0
    %391 = vmatprep.subr.mxu0 0.0
    %392 = vmatpush1.msra.mxu0 0.0
    %393 = vmatprep.subr.mxu0 0.0
    %394 = vmatpush1.msra.mxu0 0.0
    %395 = vmatprep.subr.mxu0 0.0
    %396 = vmatpush1.msra.mxu0 0.0
    %397 = vmatprep.subr.mxu0 0.0
    %398 = vmatpush1.msra.mxu0 0.0
    %399 = vmatprep.subr.mxu0 0.0
    %400 = vmatpush1.msra.mxu0 0.0
    %401 = vmatprep.subr.mxu0 0.0
    %402 = vmatpush1.msra.mxu0 0.0
    %403 = vmatprep.subr.mxu0 0.0
    %404 = vmatpush1.msra.mxu0 0.0
    %405 = vmatprep.subr.mxu0 0.0
    %406 = vmatpush1.msra.mxu0 0.0
    %407 = vmatprep.subr.mxu0 0.0
    %408 = vmatpush1.msra.mxu0 0.0
    %409 = vmatprep.subr.mxu0 0.0
    %410 = vmatpush1.msra.mxu0 0.0
    %411 = vmatprep.subr.mxu0 0.0
    %412 = vmatpush1.msra.mxu0 0.0
    %413 = vmatprep.subr.mxu0 0.0
    %414 = vmatpush1.msra.mxu0 0.0
    %415 = vmatprep.subr.mxu0 0.0
    %416 = vmatpush1.msra.mxu0 0.0
    %417 = vmatprep.subr.mxu0 0.0
    %418 = vmatpush1.msra.mxu0 0.0
    %419 = vmatprep.subr.mxu0 0.0
    %420 = vmatpush1.msra.mxu0 0.0
    %421 = vmatprep.subr.mxu0 0.0
    %422 = vmatpush1.msra.mxu0 0.0
    %423 = vmatprep.subr.mxu0 0.0
    %424 = vmatpush1.msra.mxu0 0.0
    %425 = vmatprep.subr.mxu0 0.0
    %426 = vmatpush1.msra.mxu0 0.0
    %427 = vmatprep.subr.mxu0 0.0
    %428 = vmatpush1.msra.mxu0 0.0
    %429 = vmatprep.subr.mxu0 0.0
    %430 = vmatpush1.msra.mxu0 0.0
    %431 = vmatprep.mubr.f32.mxu0 0.0
    %432 = vmatmul.mubr.f32.gmra.mrb[0].mxu0 %v282
    %v433 = vpop.f32.mrb[0].mxu0
    %v434 = vadd.f32 %v207, %v433
    %v435 = vpop.f32.mrb[0].mxu0
    %v436 = vadd.f32 %v209, %v435
    %437 = vdwg.mxu0
    %438 = vmatprep.subr.mxu0 %v294
    %439 = vmatpush1.msra.mxu0 %v292
    %440 = vmatprep.subr.mxu0 0.0
    %441 = vmatpush1.msra.mxu0 0.0
    %442 = vmatprep.subr.mxu0 0.0
    %443 = vmatpush1.msra.mxu0 0.0
    %444 = vmatprep.subr.mxu0 0.0
    %445 = vmatpush1.msra.mxu0 0.0
    %446 = vmatprep.subr.mxu0 0.0
    %447 = vmatpush1.msra.mxu0 0.0
    %448 = vmatprep.subr.mxu0 0.0
    %449 = vmatpush1.msra.mxu0 0.0
    %450 = vmatprep.subr.mxu0 0.0
    %451 = vmatpush1.msra.mxu0 0.0
    %452 = vmatprep.subr.mxu0 0.0
    %453 = vmatpush1.msra.mxu0 0.0
    %454 = vmatprep.subr.mxu0 0.0
    %455 = vmatpush1.msra.mxu0 0.0
    %456 = vmatprep.subr.mxu0 0.0
    %457 = vmatpush1.msra.mxu0 0.0
    %458 = vmatprep.subr.mxu0 0.0
    %459 = vmatpush1.msra.mxu0 0.0
    %460 = vmatprep.subr.mxu0 0.0
    %461 = vmatpush1.msra.mxu0 0.0
    %462 = vmatprep.subr.mxu0 0.0
    %463 = vmatpush1.msra.mxu0 0.0
    %464 = vmatprep.subr.mxu0 0.0
    %465 = vmatpush1.msra.mxu0 0.0
    %466 = vmatprep.subr.mxu0 0.0
    %467 = vmatpush1.msra.mxu0 0.0
    %468 = vmatprep.subr.mxu0 0.0
    %469 = vmatpush1.msra.mxu0 0.0
    %470 = vmatprep.subr.mxu0 0.0
    %471 = vmatpush1.msra.mxu0 0.0
    %472 = vmatprep.subr.mxu0 0.0
    %473 = vmatpush1.msra.mxu0 0.0
    %474 = vmatprep.subr.mxu0 0.0
    %475 = vmatpush1.msra.mxu0 0.0
    %476 = vmatprep.subr.mxu0 0.0
    %477 = vmatpush1.msra.mxu0 0.0
    %478 = vmatprep.subr.mxu0 0.0
    %479 = vmatpush1.msra.mxu0 0.0
    %480 = vmatprep.subr.mxu0 0.0
    %481 = vmatpush1.msra.mxu0 0.0
    %482 = vmatprep.subr.mxu0 0.0
    %483 = vmatpush1.msra.mxu0 0.0
    %484 = vmatprep.subr.mxu0 0.0
    %485 = vmatpush1.msra.mxu0 0.0
    %486 = vmatprep.subr.mxu0 0.0
    %487 = vmatpush1.msra.mxu0 0.0
    %488 = vmatprep.subr.mxu0 0.0
    %489 = vmatpush1.msra.mxu0 0.0
    %490 = vmatprep.subr.mxu0 0.0
    %491 = vmatpush1.msra.mxu0 0.0
    %492 = vmatprep.subr.mxu0 0.0
    %493 = vmatpush1.msra.mxu0 0.0
    %494 = vmatprep.subr.mxu0 0.0
    %495 = vmatpush1.msra.mxu0 0.0
    %496 = vmatprep.subr.mxu0 0.0
    %497 = vmatpush1.msra.mxu0 0.0
    %498 = vmatprep.subr.mxu0 0.0
    %499 = vmatpush1.msra.mxu0 0.0
    %500 = vmatprep.subr.mxu0 0.0
    %501 = vmatpush1.msra.mxu0 0.0
    %502 = vmatprep.mubr.f32.mxu0 0.0
    %503 = vmatmul.mubr.f32.gmra.mrb[0].mxu0 %v282
    %v504 = vpop.f32.mrb[0].mxu0
    %v505 = vadd.f32 %v278, %v504
    %v506 = vpop.f32.mrb[0].mxu0
    %v507 = vadd.f32 %v280, %v506
    %508 = vdwg.mxu0
    %509 = vrot.lane.b32.xlu0 %v19, 120
    %v510 = vpop.permute.xlu0 %509
    %511 = vrot.lane.b32.xlu0 %v15, 126
    %v512 = vpop.permute.xlu0 %511
    %513 = vrot.lane.b32.xlu0 %v29, 126
    %v514 = vpop.permute.xlu0 %513
    %515 = vrot.lane.b32.xlu0 %v16, 126
    %v516 = vpop.permute.xlu0 %515
    %517 = vrot.lane.b32.xlu0 %v30, 126
    %v518 = vpop.permute.xlu0 %517
    %519 = vrot.lane.b32.xlu0 %v17, 126
    %v520 = vpop.permute.xlu0 %519
    %521 = vrot.lane.b32.xlu0 %v31, 126
    %v522 = vpop.permute.xlu0 %521
    %523 = vrot.lane.b32.xlu0 %v18, 126
    %v524 = vpop.permute.xlu0 %523
    %vm525 = vcmask 1031168
    %v526 = vsel %vm525, %v512, %v514
    %v527 = vsel %vm525, %v514, %v516
    %v528 = vsel %vm525, %v516, %v518
    %v529 = vsel %vm525, %v518, %v520
    %v530 = vsel %vm525, %v520, %v522
    %v531 = vsel %vm525, %v522, %v524
    %v532 = vsel %vm53, %v510, 0
    %v534 = vsel %vm56, %v526, 0
    %v536 = vsel %vm56, %v527, 0
    %v538 = vsel %vm56, %v528, 0
    %v540 = vsel %vm56, %v529, 0
    %v542 = vsel %vm56, %v530, 0
    %v544 = vsel %vm56, %v531, 0
    %546 = vmatprep.subr.mxu0 %v536
    %547 = vmatpush1.msra.mxu0 %v534
    %548 = vmatprep.subr.mxu0 0.0
    %549 = vmatpush1.msra.mxu0 0.0
    %550 = vmatprep.subr.mxu0 0.0
    %551 = vmatpush1.msra.mxu0 0.0
    %552 = vmatprep.subr.mxu0 0.0
    %553 = vmatpush1.msra.mxu0 0.0
    %554 = vmatprep.subr.mxu0 0.0
    %555 = vmatpush1.msra.mxu0 0.0
    %556 = vmatprep.subr.mxu0 0.0
    %557 = vmatpush1.msra.mxu0 0.0
    %558 = vmatprep.subr.mxu0 0.0
    %559 = vmatpush1.msra.mxu0 0.0
    %560 = vmatprep.subr.mxu0 0.0
    %561 = vmatpush1.msra.mxu0 0.0
    %562 = vmatprep.subr.mxu0 0.0
    %563 = vmatpush1.msra.mxu0 0.0
    %564 = vmatprep.subr.mxu0 0.0
    %565 = vmatpush1.msra.mxu0 0.0
    %566 = vmatprep.subr.mxu0 0.0
    %567 = vmatpush1.msra.mxu0 0.0
    %568 = vmatprep.subr.mxu0 0.0
    %569 = vmatpush1.msra.mxu0 0.0
    %570 = vmatprep.subr.mxu0 0.0
    %571 = vmatpush1.msra.mxu0 0.0
    %572 = vmatprep.subr.mxu0 0.0
    %573 = vmatpush1.msra.mxu0 0.0
    %574 = vmatprep.subr.mxu0 0.0
    %575 = vmatpush1.msra.mxu0 0.0
    %576 = vmatprep.subr.mxu0 0.0
    %577 = vmatpush1.msra.mxu0 0.0
    %578 = vmatprep.subr.mxu0 0.0
    %579 = vmatpush1.msra.mxu0 0.0
    %580 = vmatprep.subr.mxu0 0.0
    %581 = vmatpush1.msra.mxu0 0.0
    %582 = vmatprep.subr.mxu0 0.0
    %583 = vmatpush1.msra.mxu0 0.0
    %584 = vmatprep.subr.mxu0 0.0
    %585 = vmatpush1.msra.mxu0 0.0
    %586 = vmatprep.subr.mxu0 0.0
    %587 = vmatpush1.msra.mxu0 0.0
    %588 = vmatprep.subr.mxu0 0.0
    %589 = vmatpush1.msra.mxu0 0.0
    %590 = vmatprep.subr.mxu0 0.0
    %591 = vmatpush1.msra.mxu0 0.0
    %592 = vmatprep.subr.mxu0 0.0
    %593 = vmatpush1.msra.mxu0 0.0
    %594 = vmatprep.subr.mxu0 0.0
    %595 = vmatpush1.msra.mxu0 0.0
    %596 = vmatprep.subr.mxu0 0.0
    %597 = vmatpush1.msra.mxu0 0.0
    %598 = vmatprep.subr.mxu0 0.0
    %599 = vmatpush1.msra.mxu0 0.0
    %600 = vmatprep.subr.mxu0 0.0
    %601 = vmatpush1.msra.mxu0 0.0
    %602 = vmatprep.subr.mxu0 0.0
    %603 = vmatpush1.msra.mxu0 0.0
    %604 = vmatprep.subr.mxu0 0.0
    %605 = vmatpush1.msra.mxu0 0.0
    %606 = vmatprep.subr.mxu0 0.0
    %607 = vmatpush1.msra.mxu0 0.0
    %608 = vmatprep.subr.mxu0 0.0
    %609 = vmatpush1.msra.mxu0 0.0
    %610 = vmatprep.mubr.f32.mxu0 0.0
    %611 = vmatmul.mubr.f32.gmra.mrb[0].mxu0 %v532
    %v612 = vpop.f32.mrb[0].mxu0
    %v613 = vadd.f32 0.0, %v612
    %v614 = vpop.f32.mrb[0].mxu0
    %v615 = vadd.f32 0.0, %v614
    %616 = vdwg.mxu0
    %617 = vmatprep.subr.mxu0 %v540
    %618 = vmatpush1.msra.mxu0 %v538
    %619 = vmatprep.subr.mxu0 0.0
    %620 = vmatpush1.msra.mxu0 0.0
    %621 = vmatprep.subr.mxu0 0.0
    %622 = vmatpush1.msra.mxu0 0.0
    %623 = vmatprep.subr.mxu0 0.0
    %624 = vmatpush1.msra.mxu0 0.0
    %625 = vmatprep.subr.mxu0 0.0
    %626 = vmatpush1.msra.mxu0 0.0
    %627 = vmatprep.subr.mxu0 0.0
    %628 = vmatpush1.msra.mxu0 0.0
    %629 = vmatprep.subr.mxu0 0.0
    %630 = vmatpush1.msra.mxu0 0.0
    %631 = vmatprep.subr.mxu0 0.0
    %632 = vmatpush1.msra.mxu0 0.0
    %633 = vmatprep.subr.mxu0 0.0
    %634 = vmatpush1.msra.mxu0 0.0
    %635 = vmatprep.subr.mxu0 0.0
    %636 = vmatpush1.msra.mxu0 0.0
    %637 = vmatprep.subr.mxu0 0.0
    %638 = vmatpush1.msra.mxu0 0.0
    %639 = vmatprep.subr.mxu0 0.0
    %640 = vmatpush1.msra.mxu0 0.0
    %641 = vmatprep.subr.mxu0 0.0
    %642 = vmatpush1.msra.mxu0 0.0
    %643 = vmatprep.subr.mxu0 0.0
    %644 = vmatpush1.msra.mxu0 0.0
    %645 = vmatprep.subr.mxu0 0.0
    %646 = vmatpush1.msra.mxu0 0.0
    %647 = vmatprep.subr.mxu0 0.0
    %648 = vmatpush1.msra.mxu0 0.0
    %649 = vmatprep.subr.mxu0 0.0
    %650 = vmatpush1.msra.mxu0 0.0
    %651 = vmatprep.subr.mxu0 0.0
    %652 = vmatpush1.msra.mxu0 0.0
    %653 = vmatprep.subr.mxu0 0.0
    %654 = vmatpush1.msra.mxu0 0.0
    %655 = vmatprep.subr.mxu0 0.0
    %656 = vmatpush1.msra.mxu0 0.0
    %657 = vmatprep.subr.mxu0 0.0
    %658 = vmatpush1.msra.mxu0 0.0
    %659 = vmatprep.subr.mxu0 0.0
    %660 = vmatpush1.msra.mxu0 0.0
    %661 = vmatprep.subr.mxu0 0.0
    %662 = vmatpush1.msra.mxu0 0.0
    %663 = vmatprep.subr.mxu0 0.0
    %664 = vmatpush1.msra.mxu0 0.0
    %665 = vmatprep.subr.mxu0 0.0
    %666 = vmatpush1.msra.mxu0 0.0
    %667 = vmatprep.subr.mxu0 0.0
    %668 = vmatpush1.msra.mxu0 0.0
    %669 = vmatprep.subr.mxu0 0.0
    %670 = vmatpush1.msra.mxu0 0.0
    %671 = vmatprep.subr.mxu0 0.0
    %672 = vmatpush1.msra.mxu0 0.0
    %673 = vmatprep.subr.mxu0 0.0
    %674 = vmatpush1.msra.mxu0 0.0
    %675 = vmatprep.subr.mxu0 0.0
    %676 = vmatpush1.msra.mxu0 0.0
    %677 = vmatprep.subr.mxu0 0.0
    %678 = vmatpush1.msra.mxu0 0.0
    %679 = vmatprep.subr.mxu0 0.0
    %680 = vmatpush1.msra.mxu0 0.0
    %681 = vmatprep.mubr.f32.mxu0 0.0
    %682 = vmatmul.mubr.f32.gmra.mrb[0].mxu0 %v532
    %v683 = vpop.f32.mrb[0].mxu0
    %v684 = vadd.f32 0.0, %v683
    %v685 = vpop.f32.mrb[0].mxu0
    %v686 = vadd.f32 0.0, %v685
    %687 = vdwg.mxu0
    %688 = vmatprep.subr.mxu0 %v544
    %689 = vmatpush1.msra.mxu0 %v542
    %690 = vmatprep.subr.mxu0 0.0
    %691 = vmatpush1.msra.mxu0 0.0
    %692 = vmatprep.subr.mxu0 0.0
    %693 = vmatpush1.msra.mxu0 0.0
    %694 = vmatprep.subr.mxu0 0.0
    %695 = vmatpush1.msra.mxu0 0.0
    %696 = vmatprep.subr.mxu0 0.0
    %697 = vmatpush1.msra.mxu0 0.0
    %698 = vmatprep.subr.mxu0 0.0
    %699 = vmatpush1.msra.mxu0 0.0
    %700 = vmatprep.subr.mxu0 0.0
    %701 = vmatpush1.msra.mxu0 0.0
    %702 = vmatprep.subr.mxu0 0.0
    %703 = vmatpush1.msra.mxu0 0.0
    %704 = vmatprep.subr.mxu0 0.0
    %705 = vmatpush1.msra.mxu0 0.0
    %706 = vmatprep.subr.mxu0 0.0
    %707 = vmatpush1.msra.mxu0 0.0
    %708 = vmatprep.subr.mxu0 0.0
    %709 = vmatpush1.msra.mxu0 0.0
    %710 = vmatprep.subr.mxu0 0.0
    %711 = vmatpush1.msra.mxu0 0.0
    %712 = vmatprep.subr.mxu0 0.0
    %713 = vmatpush1.msra.mxu0 0.0
    %714 = vmatprep.subr.mxu0 0.0
    %715 = vmatpush1.msra.mxu0 0.0
    %716 = vmatprep.subr.mxu0 0.0
    %717 = vmatpush1.msra.mxu0 0.0
    %718 = vmatprep.subr.mxu0 0.0
    %719 = vmatpush1.msra.mxu0 0.0
    %720 = vmatprep.subr.mxu0 0.0
    %721 = vmatpush1.msra.mxu0 0.0
    %722 = vmatprep.subr.mxu0 0.0
    %723 = vmatpush1.msra.mxu0 0.0
    %724 = vmatprep.subr.mxu0 0.0
    %725 = vmatpush1.msra.mxu0 0.0
    %726 = vmatprep.subr.mxu0 0.0
    %727 = vmatpush1.msra.mxu0 0.0
    %728 = vmatprep.subr.mxu0 0.0
    %729 = vmatpush1.msra.mxu0 0.0
    %730 = vmatprep.subr.mxu0 0.0
    %731 = vmatpush1.msra.mxu0 0.0
    %732 = vmatprep.subr.mxu0 0.0
    %733 = vmatpush1.msra.mxu0 0.0
    %734 = vmatprep.subr.mxu0 0.0
    %735 = vmatpush1.msra.mxu0 0.0
    %736 = vmatprep.subr.mxu0 0.0
    %737 = vmatpush1.msra.mxu0 0.0
    %738 = vmatprep.subr.mxu0 0.0
    %739 = vmatpush1.msra.mxu0 0.0
    %740 = vmatprep.subr.mxu0 0.0
    %741 = vmatpush1.msra.mxu0 0.0
    %742 = vmatprep.subr.mxu0 0.0
    %743 = vmatpush1.msra.mxu0 0.0
    %744 = vmatprep.subr.mxu0 0.0
    %745 = vmatpush1.msra.mxu0 0.0
    %746 = vmatprep.subr.mxu0 0.0
    %747 = vmatpush1.msra.mxu0 0.0
    %748 = vmatprep.subr.mxu0 0.0
    %749 = vmatpush1.msra.mxu0 0.0
    %750 = vmatprep.subr.mxu0 0.0
    %751 = vmatpush1.msra.mxu0 0.0
    %752 = vmatprep.mubr.f32.mxu0 0.0
    %753 = vmatmul.mubr.f32.gmra.mrb[0].mxu0 %v532
    %v754 = vpop.f32.mrb[0].mxu0
    %v755 = vadd.f32 0.0, %v754
    %v756 = vpop.f32.mrb[0].mxu0
    %v757 = vadd.f32 0.0, %v756
    %758 = vdwg.mxu0
    %v759 = vadd.f32 %v363, %v613
    %v760 = vadd.f32 %v365, %v615
    %v761 = vadd.f32 %v434, %v684
    %v762 = vadd.f32 %v436, %v686
    %v763 = vadd.f32 %v505, %v755
    %v764 = vadd.f32 %v507, %v757
    %765 = vrot.lane.b32.xlu0 %v19, 116
    %v766 = vpop.permute.xlu0 %765
    %767 = vrot.lane.b32.xlu0 %v15, 110
    %v768 = vpop.permute.xlu0 %767
    %769 = vrot.lane.b32.xlu0 %v29, 110
    %v770 = vpop.permute.xlu0 %769
    %771 = vrot.lane.b32.xlu0 %v16, 110
    %v772 = vpop.permute.xlu0 %771
    %773 = vrot.lane.b32.xlu0 %v30, 110
    %v774 = vpop.permute.xlu0 %773
    %775 = vrot.lane.b32.xlu0 %v17, 110
    %v776 = vpop.permute.xlu0 %775
    %777 = vrot.lane.b32.xlu0 %v31, 110
    %v778 = vpop.permute.xlu0 %777
    %779 = vrot.lane.b32.xlu0 %v18, 110
    %v780 = vpop.permute.xlu0 %779
    %vm781 = vcmask 900096
    %v782 = vsel %vm781, %v768, %v770
    %v783 = vsel %vm781, %v770, %v772
    %v784 = vsel %vm781, %v772, %v774
    %v785 = vsel %vm781, %v774, %v776
    %v786 = vsel %vm781, %v776, %v778
    %v787 = vsel %vm781, %v778, %v780
    %v788 = vsel %vm53, %v766, 0
    %v790 = vsel %vm56, %v782, 0
    %v792 = vsel %vm56, %v783, 0
    %v794 = vsel %vm56, %v784, 0
    %v796 = vsel %vm56, %v785, 0
    %v798 = vsel %vm56, %v786, 0
    %v800 = vsel %vm56, %v787, 0
    %802 = vmatprep.subr.mxu0 %v792
    %803 = vmatpush1.msra.mxu0 %v790
    %804 = vmatprep.subr.mxu0 0.0
    %805 = vmatpush1.msra.mxu0 0.0
    %806 = vmatprep.subr.mxu0 0.0
    %807 = vmatpush1.msra.mxu0 0.0
    %808 = vmatprep.subr.mxu0 0.0
    %809 = vmatpush1.msra.mxu0 0.0
    %810 = vmatprep.subr.mxu0 0.0
    %811 = vmatpush1.msra.mxu0 0.0
    %812 = vmatprep.subr.mxu0 0.0
    %813 = vmatpush1.msra.mxu0 0.0
    %814 = vmatprep.subr.mxu0 0.0
    %815 = vmatpush1.msra.mxu0 0.0
    %816 = vmatprep.subr.mxu0 0.0
    %817 = vmatpush1.msra.mxu0 0.0
    %818 = vmatprep.subr.mxu0 0.0
    %819 = vmatpush1.msra.mxu0 0.0
    %820 = vmatprep.subr.mxu0 0.0
    %821 = vmatpush1.msra.mxu0 0.0
    %822 = vmatprep.subr.mxu0 0.0
    %823 = vmatpush1.msra.mxu0 0.0
    %824 = vmatprep.subr.mxu0 0.0
    %825 = vmatpush1.msra.mxu0 0.0
    %826 = vmatprep.subr.mxu0 0.0
    %827 = vmatpush1.msra.mxu0 0.0
    %828 = vmatprep.subr.mxu0 0.0
    %829 = vmatpush1.msra.mxu0 0.0
    %830 = vmatprep.subr.mxu0 0.0
    %831 = vmatpush1.msra.mxu0 0.0
    %832 = vmatprep.subr.mxu0 0.0
    %833 = vmatpush1.msra.mxu0 0.0
    %834 = vmatprep.subr.mxu0 0.0
    %835 = vmatpush1.msra.mxu0 0.0
    %836 = vmatprep.subr.mxu0 0.0
    %837 = vmatpush1.msra.mxu0 0.0
    %838 = vmatprep.subr.mxu0 0.0
    %839 = vmatpush1.msra.mxu0 0.0
    %840 = vmatprep.subr.mxu0 0.0
    %841 = vmatpush1.msra.mxu0 0.0
    %842 = vmatprep.subr.mxu0 0.0
    %843 = vmatpush1.msra.mxu0 0.0
    %844 = vmatprep.subr.mxu0 0.0
    %845 = vmatpush1.msra.mxu0 0.0
    %846 = vmatprep.subr.mxu0 0.0
    %847 = vmatpush1.msra.mxu0 0.0
    %848 = vmatprep.subr.mxu0 0.0
    %849 = vmatpush1.msra.mxu0 0.0
    %850 = vmatprep.subr.mxu0 0.0
    %851 = vmatpush1.msra.mxu0 0.0
    %852 = vmatprep.subr.mxu0 0.0
    %853 = vmatpush1.msra.mxu0 0.0
    %854 = vmatprep.subr.mxu0 0.0
    %855 = vmatpush1.msra.mxu0 0.0
    %856 = vmatprep.subr.mxu0 0.0
    %857 = vmatpush1.msra.mxu0 0.0
    %858 = vmatprep.subr.mxu0 0.0
    %859 = vmatpush1.msra.mxu0 0.0
    %860 = vmatprep.subr.mxu0 0.0
    %861 = vmatpush1.msra.mxu0 0.0
    %862 = vmatprep.subr.mxu0 0.0
    %863 = vmatpush1.msra.mxu0 0.0
    %864 = vmatprep.subr.mxu0 0.0
    %865 = vmatpush1.msra.mxu0 0.0
    %866 = vmatprep.mubr.f32.mxu0 0.0
    %867 = vmatmul.mubr.f32.gmra.mrb[0].mxu0 %v788
    %v868 = vpop.f32.mrb[0].mxu0
    %v869 = vadd.f32 0.0, %v868
    %v870 = vpop.f32.mrb[0].mxu0
    %v871 = vadd.f32 0.0, %v870
    %872 = vdwg.mxu0
    %873 = vmatprep.subr.mxu0 %v796
    %874 = vmatpush1.msra.mxu0 %v794
    %875 = vmatprep.subr.mxu0 0.0
    %876 = vmatpush1.msra.mxu0 0.0
    %877 = vmatprep.subr.mxu0 0.0
    %878 = vmatpush1.msra.mxu0 0.0
    %879 = vmatprep.subr.mxu0 0.0
    %880 = vmatpush1.msra.mxu0 0.0
    %881 = vmatprep.subr.mxu0 0.0
    %882 = vmatpush1.msra.mxu0 0.0
    %883 = vmatprep.subr.mxu0 0.0
    %884 = vmatpush1.msra.mxu0 0.0
    %885 = vmatprep.subr.mxu0 0.0
    %886 = vmatpush1.msra.mxu0 0.0
    %887 = vmatprep.subr.mxu0 0.0
    %888 = vmatpush1.msra.mxu0 0.0
    %889 = vmatprep.subr.mxu0 0.0
    %890 = vmatpush1.msra.mxu0 0.0
    %891 = vmatprep.subr.mxu0 0.0
    %892 = vmatpush1.msra.mxu0 0.0
    %893 = vmatprep.subr.mxu0 0.0
    %894 = vmatpush1.msra.mxu0 0.0
    %895 = vmatprep.subr.mxu0 0.0
    %896 = vmatpush1.msra.mxu0 0.0
    %897 = vmatprep.subr.mxu0 0.0
    %898 = vmatpush1.msra.mxu0 0.0
    %899 = vmatprep.subr.mxu0 0.0
    %900 = vmatpush1.msra.mxu0 0.0
    %901 = vmatprep.subr.mxu0 0.0
    %902 = vmatpush1.msra.mxu0 0.0
    %903 = vmatprep.subr.mxu0 0.0
    %904 = vmatpush1.msra.mxu0 0.0
    %905 = vmatprep.subr.mxu0 0.0
    %906 = vmatpush1.msra.mxu0 0.0
    %907 = vmatprep.subr.mxu0 0.0
    %908 = vmatpush1.msra.mxu0 0.0
    %909 = vmatprep.subr.mxu0 0.0
    %910 = vmatpush1.msra.mxu0 0.0
    %911 = vmatprep.subr.mxu0 0.0
    %912 = vmatpush1.msra.mxu0 0.0
    %913 = vmatprep.subr.mxu0 0.0
    %914 = vmatpush1.msra.mxu0 0.0
    %915 = vmatprep.subr.mxu0 0.0
    %916 = vmatpush1.msra.mxu0 0.0
    %917 = vmatprep.subr.mxu0 0.0
    %918 = vmatpush1.msra.mxu0 0.0
    %919 = vmatprep.subr.mxu0 0.0
    %920 = vmatpush1.msra.mxu0 0.0
    %921 = vmatprep.subr.mxu0 0.0
    %922 = vmatpush1.msra.mxu0 0.0
    %923 = vmatprep.subr.mxu0 0.0
    %924 = vmatpush1.msra.mxu0 0.0
    %925 = vmatprep.subr.mxu0 0.0
    %926 = vmatpush1.msra.mxu0 0.0
    %927 = vmatprep.subr.mxu0 0.0
    %928 = vmatpush1.msra.mxu0 0.0
    %929 = vmatprep.subr.mxu0 0.0
    %930 = vmatpush1.msra.mxu0 0.0
    %931 = vmatprep.subr.mxu0 0.0
    %932 = vmatpush1.msra.mxu0 0.0
    %933 = vmatprep.subr.mxu0 0.0
    %934 = vmatpush1.msra.mxu0 0.0
    %935 = vmatprep.subr.mxu0 0.0
    %936 = vmatpush1.msra.mxu0 0.0
    %937 = vmatprep.mubr.f32.mxu0 0.0
    %938 = vmatmul.mubr.f32.gmra.mrb[0].mxu0 %v788
    %v939 = vpop.f32.mrb[0].mxu0
    %v940 = vadd.f32 0.0, %v939
    %v941 = vpop.f32.mrb[0].mxu0
    %v942 = vadd.f32 0.0, %v941
    %943 = vdwg.mxu0
    %944 = vmatprep.subr.mxu0 %v800
    %945 = vmatpush1.msra.mxu0 %v798
    %946 = vmatprep.subr.mxu0 0.0
    %947 = vmatpush1.msra.mxu0 0.0
    %948 = vmatprep.subr.mxu0 0.0
    %949 = vmatpush1.msra.mxu0 0.0
    %950 = vmatprep.subr.mxu0 0.0
    %951 = vmatpush1.msra.mxu0 0.0
    %952 = vmatprep.subr.mxu0 0.0
    %953 = vmatpush1.msra.mxu0 0.0
    %954 = vmatprep.subr.mxu0 0.0
    %955 = vmatpush1.msra.mxu0 0.0
    %956 = vmatprep.subr.mxu0 0.0
    %957 = vmatpush1.msra.mxu0 0.0
    %958 = vmatprep.subr.mxu0 0.0
    %959 = vmatpush1.msra.mxu0 0.0
    %960 = vmatprep.subr.mxu0 0.0
    %961 = vmatpush1.msra.mxu0 0.0
    %962 = vmatprep.subr.mxu0 0.0
    %963 = vmatpush1.msra.mxu0 0.0
    %964 = vmatprep.subr.mxu0 0.0
    %965 = vmatpush1.msra.mxu0 0.0
    %966 = vmatprep.subr.mxu0 0.0
    %967 = vmatpush1.msra.mxu0 0.0
    %968 = vmatprep.subr.mxu0 0.0
    %969 = vmatpush1.msra.mxu0 0.0
    %970 = vmatprep.subr.mxu0 0.0
    %971 = vmatpush1.msra.mxu0 0.0
    %972 = vmatprep.subr.mxu0 0.0
    %973 = vmatpush1.msra.mxu0 0.0
    %974 = vmatprep.subr.mxu0 0.0
    %975 = vmatpush1.msra.mxu0 0.0
    %976 = vmatprep.subr.mxu0 0.0
    %977 = vmatpush1.msra.mxu0 0.0
    %978 = vmatprep.subr.mxu0 0.0
    %979 = vmatpush1.msra.mxu0 0.0
    %980 = vmatprep.subr.mxu0 0.0
    %981 = vmatpush1.msra.mxu0 0.0
    %982 = vmatprep.subr.mxu0 0.0
    %983 = vmatpush1.msra.mxu0 0.0
    %984 = vmatprep.subr.mxu0 0.0
    %985 = vmatpush1.msra.mxu0 0.0
    %986 = vmatprep.subr.mxu0 0.0
    %987 = vmatpush1.msra.mxu0 0.0
    %988 = vmatprep.subr.mxu0 0.0
    %989 = vmatpush1.msra.mxu0 0.0
    %990 = vmatprep.subr.mxu0 0.0
    %991 = vmatpush1.msra.mxu0 0.0
    %992 = vmatprep.subr.mxu0 0.0
    %993 = vmatpush1.msra.mxu0 0.0
    %994 = vmatprep.subr.mxu0 0.0
    %995 = vmatpush1.msra.mxu0 0.0
    %996 = vmatprep.subr.mxu0 0.0
    %997 = vmatpush1.msra.mxu0 0.0
    %998 = vmatprep.subr.mxu0 0.0
    %999 = vmatpush1.msra.mxu0 0.0
    %1000 = vmatprep.subr.mxu0 0.0
    %1001 = vmatpush1.msra.mxu0 0.0
    %1002 = vmatprep.subr.mxu0 0.0
    %1003 = vmatpush1.msra.mxu0 0.0
    %1004 = vmatprep.subr.mxu0 0.0
    %1005 = vmatpush1.msra.mxu0 0.0
    %1006 = vmatprep.subr.mxu0 0.0
    %1007 = vmatpush1.msra.mxu0 0.0
    %1008 = vmatprep.mubr.f32.mxu0 0.0
    %1009 = vmatmul.mubr.f32.gmra.mrb[0].mxu0 %v788
    %v1010 = vpop.f32.mrb[0].mxu0
    %v1011 = vadd.f32 0.0, %v1010
    %v1012 = vpop.f32.mrb[0].mxu0
    %v1013 = vadd.f32 0.0, %v1012
    %1014 = vdwg.mxu0
    %v1015 = vadd.f32 %v759, %v869
    %v1016 = vadd.f32 %v760, %v871
    %v1017 = vadd.f32 %v761, %v940
    %v1018 = vadd.f32 %v762, %v942
    %v1019 = vadd.f32 %v763, %v1011
    %v1020 = vadd.f32 %v764, %v1013
    %1021 = vrot.lane.b32.xlu0 %v19, 112
    %v1022 = vpop.permute.xlu0 %1021
    %1023 = vrot.lane.b32.xlu0 %v15, 109
    %v1024 = vpop.permute.xlu0 %1023
    %1025 = vrot.lane.b32.xlu0 %v29, 109
    %v1026 = vpop.permute.xlu0 %1025
    %1027 = vrot.lane.b32.xlu0 %v16, 109
    %v1028 = vpop.permute.xlu0 %1027
    %1029 = vrot.lane.b32.xlu0 %v30, 109
    %v1030 = vpop.permute.xlu0 %1029
    %1031 = vrot.lane.b32.xlu0 %v17, 109
    %v1032 = vpop.permute.xlu0 %1031
    %1033 = vrot.lane.b32.xlu0 %v31, 109
    %v1034 = vpop.permute.xlu0 %1033
    %1035 = vrot.lane.b32.xlu0 %v18, 109
    %v1036 = vpop.permute.xlu0 %1035
    %vm1037 = vcmask 891904
    %v1038 = vsel %vm1037, %v1024, %v1026
    %v1039 = vsel %vm1037, %v1026, %v1028
    %v1040 = vsel %vm1037, %v1028, %v1030
    %v1041 = vsel %vm1037, %v1030, %v1032
    %v1042 = vsel %vm1037, %v1032, %v1034
    %v1043 = vsel %vm1037, %v1034, %v1036
    %v1044 = vsel %vm53, %v1022, 0
    %v1046 = vsel %vm56, %v1038, 0
    %v1048 = vsel %vm56, %v1039, 0
    %v1050 = vsel %vm56, %v1040, 0
    %v1052 = vsel %vm56, %v1041, 0
    %v1054 = vsel %vm56, %v1042, 0
    %v1056 = vsel %vm56, %v1043, 0
    %1058 = vmatprep.subr.mxu0 %v1048
    %1059 = vmatpush1.msra.mxu0 %v1046
    %1060 = vmatprep.subr.mxu0 0.0
    %1061 = vmatpush1.msra.mxu0 0.0
    %1062 = vmatprep.subr.mxu0 0.0
    %1063 = vmatpush1.msra.mxu0 0.0
    %1064 = vmatprep.subr.mxu0 0.0
    %1065 = vmatpush1.msra.mxu0 0.0
    %1066 = vmatprep.subr.mxu0 0.0
    %1067 = vmatpush1.msra.mxu0 0.0
    %1068 = vmatprep.subr.mxu0 0.0
    %1069 = vmatpush1.msra.mxu0 0.0
    %1070 = vmatprep.subr.mxu0 0.0
    %1071 = vmatpush1.msra.mxu0 0.0
    %1072 = vmatprep.subr.mxu0 0.0
    %1073 = vmatpush1.msra.mxu0 0.0
    %1074 = vmatprep.subr.mxu0 0.0
    %1075 = vmatpush1.msra.mxu0 0.0
    %1076 = vmatprep.subr.mxu0 0.0
    %1077 = vmatpush1.msra.mxu0 0.0
    %1078 = vmatprep.subr.mxu0 0.0
    %1079 = vmatpush1.msra.mxu0 0.0
    %1080 = vmatprep.subr.mxu0 0.0
    %1081 = vmatpush1.msra.mxu0 0.0
    %1082 = vmatprep.subr.mxu0 0.0
    %1083 = vmatpush1.msra.mxu0 0.0
    %1084 = vmatprep.subr.mxu0 0.0
    %1085 = vmatpush1.msra.mxu0 0.0
    %1086 = vmatprep.subr.mxu0 0.0
    %1087 = vmatpush1.msra.mxu0 0.0
    %1088 = vmatprep.subr.mxu0 0.0
    %1089 = vmatpush1.msra.mxu0 0.0
    %1090 = vmatprep.subr.mxu0 0.0
    %1091 = vmatpush1.msra.mxu0 0.0
    %1092 = vmatprep.subr.mxu0 0.0
    %1093 = vmatpush1.msra.mxu0 0.0
    %1094 = vmatprep.subr.mxu0 0.0
    %1095 = vmatpush1.msra.mxu0 0.0
    %1096 = vmatprep.subr.mxu0 0.0
    %1097 = vmatpush1.msra.mxu0 0.0
    %1098 = vmatprep.subr.mxu0 0.0
    %1099 = vmatpush1.msra.mxu0 0.0
    %1100 = vmatprep.subr.mxu0 0.0
    %1101 = vmatpush1.msra.mxu0 0.0
    %1102 = vmatprep.subr.mxu0 0.0
    %1103 = vmatpush1.msra.mxu0 0.0
    %1104 = vmatprep.subr.mxu0 0.0
    %1105 = vmatpush1.msra.mxu0 0.0
    %1106 = vmatprep.subr.mxu0 0.0
    %1107 = vmatpush1.msra.mxu0 0.0
    %1108 = vmatprep.subr.mxu0 0.0
    %1109 = vmatpush1.msra.mxu0 0.0
    %1110 = vmatprep.subr.mxu0 0.0
    %1111 = vmatpush1.msra.mxu0 0.0
    %1112 = vmatprep.subr.mxu0 0.0
    %1113 = vmatpush1.msra.mxu0 0.0
    %1114 = vmatprep.subr.mxu0 0.0
    %1115 = vmatpush1.msra.mxu0 0.0
    %1116 = vmatprep.subr.mxu0 0.0
    %1117 = vmatpush1.msra.mxu0 0.0
    %1118 = vmatprep.subr.mxu0 0.0
    %1119 = vmatpush1.msra.mxu0 0.0
    %1120 = vmatprep.subr.mxu0 0.0
    %1121 = vmatpush1.msra.mxu0 0.0
    %1122 = vmatprep.mubr.f32.mxu0 0.0
    %1123 = vmatmul.mubr.f32.gmra.mrb[0].mxu0 %v1044
    %v1124 = vpop.f32.mrb[0].mxu0
    %v1125 = vadd.f32 0.0, %v1124
    %v1126 = vpop.f32.mrb[0].mxu0
    %v1127 = vadd.f32 0.0, %v1126
    %1128 = vdwg.mxu0
    %1129 = vmatprep.subr.mxu0 %v1052
    %1130 = vmatpush1.msra.mxu0 %v1050
    %1131 = vmatprep.subr.mxu0 0.0
    %1132 = vmatpush1.msra.mxu0 0.0
    %1133 = vmatprep.subr.mxu0 0.0
    %1134 = vmatpush1.msra.mxu0 0.0
    %1135 = vmatprep.subr.mxu0 0.0
    %1136 = vmatpush1.msra.mxu0 0.0
    %1137 = vmatprep.subr.mxu0 0.0
    %1138 = vmatpush1.msra.mxu0 0.0
    %1139 = vmatprep.subr.mxu0 0.0
    %1140 = vmatpush1.msra.mxu0 0.0
    %1141 = vmatprep.subr.mxu0 0.0
    %1142 = vmatpush1.msra.mxu0 0.0
    %1143 = vmatprep.subr.mxu0 0.0
    %1144 = vmatpush1.msra.mxu0 0.0
    %1145 = vmatprep.subr.mxu0 0.0
    %1146 = vmatpush1.msra.mxu0 0.0
    %1147 = vmatprep.subr.mxu0 0.0
    %1148 = vmatpush1.msra.mxu0 0.0
    %1149 = vmatprep.subr.mxu0 0.0
    %1150 = vmatpush1.msra.mxu0 0.0
    %1151 = vmatprep.subr.mxu0 0.0
    %1152 = vmatpush1.msra.mxu0 0.0
    %1153 = vmatprep.subr.mxu0 0.0
    %1154 = vmatpush1.msra.mxu0 0.0
    %1155 = vmatprep.subr.mxu0 0.0
    %1156 = vmatpush1.msra.mxu0 0.0
    %1157 = vmatprep.subr.mxu0 0.0
    %1158 = vmatpush1.msra.mxu0 0.0
    %1159 = vmatprep.subr.mxu0 0.0
    %1160 = vmatpush1.msra.mxu0 0.0
    %1161 = vmatprep.subr.mxu0 0.0
    %1162 = vmatpush1.msra.mxu0 0.0
    %1163 = vmatprep.subr.mxu0 0.0
    %1164 = vmatpush1.msra.mxu0 0.0
    %1165 = vmatprep.subr.mxu0 0.0
    %1166 = vmatpush1.msra.mxu0 0.0
    %1167 = vmatprep.subr.mxu0 0.0
    %1168 = vmatpush1.msra.mxu0 0.0
    %1169 = vmatprep.subr.mxu0 0.0
    %1170 = vmatpush1.msra.mxu0 0.0
    %1171 = vmatprep.subr.mxu0 0.0
    %1172 = vmatpush1.msra.mxu0 0.0
    %1173 = vmatprep.subr.mxu0 0.0
    %1174 = vmatpush1.msra.mxu0 0.0
    %1175 = vmatprep.subr.mxu0 0.0
    %1176 = vmatpush1.msra.mxu0 0.0
    %1177 = vmatprep.subr.mxu0 0.0
    %1178 = vmatpush1.msra.mxu0 0.0
    %1179 = vmatprep.subr.mxu0 0.0
    %1180 = vmatpush1.msra.mxu0 0.0
    %1181 = vmatprep.subr.mxu0 0.0
    %1182 = vmatpush1.msra.mxu0 0.0
    %1183 = vmatprep.subr.mxu0 0.0
    %1184 = vmatpush1.msra.mxu0 0.0
    %1185 = vmatprep.subr.mxu0 0.0
    %1186 = vmatpush1.msra.mxu0 0.0
    %1187 = vmatprep.subr.mxu0 0.0
    %1188 = vmatpush1.msra.mxu0 0.0
    %1189 = vmatprep.subr.mxu0 0.0
    %1190 = vmatpush1.msra.mxu0 0.0
    %1191 = vmatprep.subr.mxu0 0.0
    %1192 = vmatpush1.msra.mxu0 0.0
    %1193 = vmatprep.mubr.f32.mxu0 0.0
    %1194 = vmatmul.mubr.f32.gmra.mrb[0].mxu0 %v1044
    %v1195 = vpop.f32.mrb[0].mxu0
    %v1196 = vadd.f32 0.0, %v1195
    %v1197 = vpop.f32.mrb[0].mxu0
    %v1198 = vadd.f32 0.0, %v1197
    %1199 = vdwg.mxu0
    %1200 = vmatprep.subr.mxu0 %v1056
    %1201 = vmatpush1.msra.mxu0 %v1054
    %1202 = vmatprep.subr.mxu0 0.0
    %1203 = vmatpush1.msra.mxu0 0.0
    %1204 = vmatprep.subr.mxu0 0.0
    %1205 = vmatpush1.msra.mxu0 0.0
    %1206 = vmatprep.subr.mxu0 0.0
    %1207 = vmatpush1.msra.mxu0 0.0
    %1208 = vmatprep.subr.mxu0 0.0
    %1209 = vmatpush1.msra.mxu0 0.0
    %1210 = vmatprep.subr.mxu0 0.0
    %1211 = vmatpush1.msra.mxu0 0.0
    %1212 = vmatprep.subr.mxu0 0.0
    %1213 = vmatpush1.msra.mxu0 0.0
    %1214 = vmatprep.subr.mxu0 0.0
    %1215 = vmatpush1.msra.mxu0 0.0
    %1216 = vmatprep.subr.mxu0 0.0
    %1217 = vmatpush1.msra.mxu0 0.0
    %1218 = vmatprep.subr.mxu0 0.0
    %1219 = vmatpush1.msra.mxu0 0.0
    %1220 = vmatprep.subr.mxu0 0.0
    %1221 = vmatpush1.msra.mxu0 0.0
    %1222 = vmatprep.subr.mxu0 0.0
    %1223 = vmatpush1.msra.mxu0 0.0
    %1224 = vmatprep.subr.mxu0 0.0
    %1225 = vmatpush1.msra.mxu0 0.0
    %1226 = vmatprep.subr.mxu0 0.0
    %1227 = vmatpush1.msra.mxu0 0.0
    %1228 = vmatprep.subr.mxu0 0.0
    %1229 = vmatpush1.msra.mxu0 0.0
    %1230 = vmatprep.subr.mxu0 0.0
    %1231 = vmatpush1.msra.mxu0 0.0
    %1232 = vmatprep.subr.mxu0 0.0
    %1233 = vmatpush1.msra.mxu0 0.0
    %1234 = vmatprep.subr.mxu0 0.0
    %1235 = vmatpush1.msra.mxu0 0.0
    %1236 = vmatprep.subr.mxu0 0.0
    %1237 = vmatpush1.msra.mxu0 0.0
    %1238 = vmatprep.subr.mxu0 0.0
    %1239 = vmatpush1.msra.mxu0 0.0
    %1240 = vmatprep.subr.mxu0 0.0
    %1241 = vmatpush1.msra.mxu0 0.0
    %1242 = vmatprep.subr.mxu0 0.0
    %1243 = vmatpush1.msra.mxu0 0.0
    %1244 = vmatprep.subr.mxu0 0.0
    %1245 = vmatpush1.msra.mxu0 0.0
    %1246 = vmatprep.subr.mxu0 0.0
    %1247 = vmatpush1.msra.mxu0 0.0
    %1248 = vmatprep.subr.mxu0 0.0
    %1249 = vmatpush1.msra.mxu0 0.0
    %1250 = vmatprep.subr.mxu0 0.0
    %1251 = vmatpush1.msra.mxu0 0.0
    %1252 = vmatprep.subr.mxu0 0.0
    %1253 = vmatpush1.msra.mxu0 0.0
    %1254 = vmatprep.subr.mxu0 0.0
    %1255 = vmatpush1.msra.mxu0 0.0
    %1256 = vmatprep.subr.mxu0 0.0
    %1257 = vmatpush1.msra.mxu0 0.0
    %1258 = vmatprep.subr.mxu0 0.0
    %1259 = vmatpush1.msra.mxu0 0.0
    %1260 = vmatprep.subr.mxu0 0.0
    %1261 = vmatpush1.msra.mxu0 0.0
    %1262 = vmatprep.subr.mxu0 0.0
    %1263 = vmatpush1.msra.mxu0 0.0
    %1264 = vmatprep.mubr.f32.mxu0 0.0
    %1265 = vmatmul.mubr.f32.gmra.mrb[0].mxu0 %v1044
    %v1266 = vpop.f32.mrb[0].mxu0
    %v1267 = vadd.f32 0.0, %v1266
    %v1268 = vpop.f32.mrb[0].mxu0
    %v1269 = vadd.f32 0.0, %v1268
    %1270 = vdwg.mxu0
    %v1271 = vadd.f32 %v1015, %v1125
    %v1272 = vadd.f32 %v1016, %v1127
    %v1273 = vadd.f32 %v1017, %v1196
    %v1274 = vadd.f32 %v1018, %v1198
    %v1275 = vadd.f32 %v1019, %v1267
    %v1276 = vadd.f32 %v1020, %v1269
    %1277 = vrot.lane.b32.xlu0 %v19, 108
    %v1278 = vpop.permute.xlu0 %1277
    %1279 = vrot.lane.b32.xlu0 %v15, 108
    %v1280 = vpop.permute.xlu0 %1279
    %1281 = vrot.lane.b32.xlu0 %v29, 108
    %v1282 = vpop.permute.xlu0 %1281
    %1283 = vrot.lane.b32.xlu0 %v16, 108
    %v1284 = vpop.permute.xlu0 %1283
    %1285 = vrot.lane.b32.xlu0 %v30, 108
    %v1286 = vpop.permute.xlu0 %1285
    %1287 = vrot.lane.b32.xlu0 %v17, 108
    %v1288 = vpop.permute.xlu0 %1287
    %1289 = vrot.lane.b32.xlu0 %v31, 108
    %v1290 = vpop.permute.xlu0 %1289
    %1291 = vrot.lane.b32.xlu0 %v18, 108
    %v1292 = vpop.permute.xlu0 %1291
    %vm1293 = vcmask 883712
    %v1294 = vsel %vm1293, %v1280, %v1282
    %v1295 = vsel %vm1293, %v1282, %v1284
    %v1296 = vsel %vm1293, %v1284, %v1286
    %v1297 = vsel %vm1293, %v1286, %v1288
    %v1298 = vsel %vm1293, %v1288, %v1290
    %v1299 = vsel %vm1293, %v1290, %v1292
    %v1300 = vsel %vm53, %v1278, 0
    %v1302 = vsel %vm56, %v1294, 0
    %v1304 = vsel %vm56, %v1295, 0
    %v1306 = vsel %vm56, %v1296, 0
    %v1308 = vsel %vm56, %v1297, 0
    %v1310 = vsel %vm56, %v1298, 0
    %v1312 = vsel %vm56, %v1299, 0
    %1314 = vmatprep.subr.mxu0 %v1304
    %1315 = vmatpush1.msra.mxu0 %v1302
    %1316 = vmatprep.subr.mxu0 0.0
    %1317 = vmatpush1.msra.mxu0 0.0
    %1318 = vmatprep.subr.mxu0 0.0
    %1319 = vmatpush1.msra.mxu0 0.0
    %1320 = vmatprep.subr.mxu0 0.0
    %1321 = vmatpush1.msra.mxu0 0.0
    %1322 = vmatprep.subr.mxu0 0.0
    %1323 = vmatpush1.msra.mxu0 0.0
    %1324 = vmatprep.subr.mxu0 0.0
    %1325 = vmatpush1.msra.mxu0 0.0
    %1326 = vmatprep.subr.mxu0 0.0
    %1327 = vmatpush1.msra.mxu0 0.0
    %1328 = vmatprep.subr.mxu0 0.0
    %1329 = vmatpush1.msra.mxu0 0.0
    %1330 = vmatprep.subr.mxu0 0.0
    %1331 = vmatpush1.msra.mxu0 0.0
    %1332 = vmatprep.subr.mxu0 0.0
    %1333 = vmatpush1.msra.mxu0 0.0
    %1334 = vmatprep.subr.mxu0 0.0
    %1335 = vmatpush1.msra.mxu0 0.0
    %1336 = vmatprep.subr.mxu0 0.0
    %1337 = vmatpush1.msra.mxu0 0.0
    %1338 = vmatprep.subr.mxu0 0.0
    %1339 = vmatpush1.msra.mxu0 0.0
    %1340 = vmatprep.subr.mxu0 0.0
    %1341 = vmatpush1.msra.mxu0 0.0
    %1342 = vmatprep.subr.mxu0 0.0
    %1343 = vmatpush1.msra.mxu0 0.0
    %1344 = vmatprep.subr.mxu0 0.0
    %1345 = vmatpush1.msra.mxu0 0.0
    %1346 = vmatprep.subr.mxu0 0.0
    %1347 = vmatpush1.msra.mxu0 0.0
    %1348 = vmatprep.subr.mxu0 0.0
    %1349 = vmatpush1.msra.mxu0 0.0
    %1350 = vmatprep.subr.mxu0 0.0
    %1351 = vmatpush1.msra.mxu0 0.0
    %1352 = vmatprep.subr.mxu0 0.0
    %1353 = vmatpush1.msra.mxu0 0.0
    %1354 = vmatprep.subr.mxu0 0.0
    %1355 = vmatpush1.msra.mxu0 0.0
    %1356 = vmatprep.subr.mxu0 0.0
    %1357 = vmatpush1.msra.mxu0 0.0
    %1358 = vmatprep.subr.mxu0 0.0
    %1359 = vmatpush1.msra.mxu0 0.0
    %1360 = vmatprep.subr.mxu0 0.0
    %1361 = vmatpush1.msra.mxu0 0.0
    %1362 = vmatprep.subr.mxu0 0.0
    %1363 = vmatpush1.msra.mxu0 0.0
    %1364 = vmatprep.subr.mxu0 0.0
    %1365 = vmatpush1.msra.mxu0 0.0
    %1366 = vmatprep.subr.mxu0 0.0
    %1367 = vmatpush1.msra.mxu0 0.0
    %1368 = vmatprep.subr.mxu0 0.0
    %1369 = vmatpush1.msra.mxu0 0.0
    %1370 = vmatprep.subr.mxu0 0.0
    %1371 = vmatpush1.msra.mxu0 0.0
    %1372 = vmatprep.subr.mxu0 0.0
    %1373 = vmatpush1.msra.mxu0 0.0
    %1374 = vmatprep.subr.mxu0 0.0
    %1375 = vmatpush1.msra.mxu0 0.0
    %1376 = vmatprep.subr.mxu0 0.0
    %1377 = vmatpush1.msra.mxu0 0.0
    %1378 = vmatprep.mubr.f32.mxu0 0.0
    %1379 = vmatmul.mubr.f32.gmra.mrb[0].mxu0 %v1300
    %v1380 = vpop.f32.mrb[0].mxu0
    %v1381 = vadd.f32 0.0, %v1380
    %v1382 = vpop.f32.mrb[0].mxu0
    %v1383 = vadd.f32 0.0, %v1382
    %1384 = vdwg.mxu0
    %1385 = vmatprep.subr.mxu0 %v1308
    %1386 = vmatpush1.msra.mxu0 %v1306
    %1387 = vmatprep.subr.mxu0 0.0
    %1388 = vmatpush1.msra.mxu0 0.0
    %1389 = vmatprep.subr.mxu0 0.0
    %1390 = vmatpush1.msra.mxu0 0.0
    %1391 = vmatprep.subr.mxu0 0.0
    %1392 = vmatpush1.msra.mxu0 0.0
    %1393 = vmatprep.subr.mxu0 0.0
    %1394 = vmatpush1.msra.mxu0 0.0
    %1395 = vmatprep.subr.mxu0 0.0
    %1396 = vmatpush1.msra.mxu0 0.0
    %1397 = vmatprep.subr.mxu0 0.0
    %1398 = vmatpush1.msra.mxu0 0.0
    %1399 = vmatprep.subr.mxu0 0.0
    %1400 = vmatpush1.msra.mxu0 0.0
    %1401 = vmatprep.subr.mxu0 0.0
    %1402 = vmatpush1.msra.mxu0 0.0
    %1403 = vmatprep.subr.mxu0 0.0
    %1404 = vmatpush1.msra.mxu0 0.0
    %1405 = vmatprep.subr.mxu0 0.0
    %1406 = vmatpush1.msra.mxu0 0.0
    %1407 = vmatprep.subr.mxu0 0.0
    %1408 = vmatpush1.msra.mxu0 0.0
    %1409 = vmatprep.subr.mxu0 0.0
    %1410 = vmatpush1.msra.mxu0 0.0
    %1411 = vmatprep.subr.mxu0 0.0
    %1412 = vmatpush1.msra.mxu0 0.0
    %1413 = vmatprep.subr.mxu0 0.0
    %1414 = vmatpush1.msra.mxu0 0.0
    %1415 = vmatprep.subr.mxu0 0.0
    %1416 = vmatpush1.msra.mxu0 0.0
    %1417 = vmatprep.subr.mxu0 0.0
    %1418 = vmatpush1.msra.mxu0 0.0
    %1419 = vmatprep.subr.mxu0 0.0
    %1420 = vmatpush1.msra.mxu0 0.0
    %1421 = vmatprep.subr.mxu0 0.0
    %1422 = vmatpush1.msra.mxu0 0.0
    %1423 = vmatprep.subr.mxu0 0.0
    %1424 = vmatpush1.msra.mxu0 0.0
    %1425 = vmatprep.subr.mxu0 0.0
    %1426 = vmatpush1.msra.mxu0 0.0
    %1427 = vmatprep.subr.mxu0 0.0
    %1428 = vmatpush1.msra.mxu0 0.0
    %1429 = vmatprep.subr.mxu0 0.0
    %1430 = vmatpush1.msra.mxu0 0.0
    %1431 = vmatprep.subr.mxu0 0.0
    %1432 = vmatpush1.msra.mxu0 0.0
    %1433 = vmatprep.subr.mxu0 0.0
    %1434 = vmatpush1.msra.mxu0 0.0
    %1435 = vmatprep.subr.mxu0 0.0
    %1436 = vmatpush1.msra.mxu0 0.0
    %1437 = vmatprep.subr.mxu0 0.0
    %1438 = vmatpush1.msra.mxu0 0.0
    %1439 = vmatprep.subr.mxu0 0.0
    %1440 = vmatpush1.msra.mxu0 0.0
    %1441 = vmatprep.subr.mxu0 0.0
    %1442 = vmatpush1.msra.mxu0 0.0
    %1443 = vmatprep.subr.mxu0 0.0
    %1444 = vmatpush1.msra.mxu0 0.0
    %1445 = vmatprep.subr.mxu0 0.0
    %1446 = vmatpush1.msra.mxu0 0.0
    %1447 = vmatprep.subr.mxu0 0.0
    %1448 = vmatpush1.msra.mxu0 0.0
    %1449 = vmatprep.mubr.f32.mxu0 0.0
    %1450 = vmatmul.mubr.f32.gmra.mrb[0].mxu0 %v1300
    %v1451 = vpop.f32.mrb[0].mxu0
    %v1452 = vadd.f32 0.0, %v1451
    %v1453 = vpop.f32.mrb[0].mxu0
    %v1454 = vadd.f32 0.0, %v1453
    %1455 = vdwg.mxu0
    %1456 = vmatprep.subr.mxu0 %v1312
    %1457 = vmatpush1.msra.mxu0 %v1310
    %1458 = vmatprep.subr.mxu0 0.0
    %1459 = vmatpush1.msra.mxu0 0.0
    %1460 = vmatprep.subr.mxu0 0.0
    %1461 = vmatpush1.msra.mxu0 0.0
    %1462 = vmatprep.subr.mxu0 0.0
    %1463 = vmatpush1.msra.mxu0 0.0
    %1464 = vmatprep.subr.mxu0 0.0
    %1465 = vmatpush1.msra.mxu0 0.0
    %1466 = vmatprep.subr.mxu0 0.0
    %1467 = vmatpush1.msra.mxu0 0.0
    %1468 = vmatprep.subr.mxu0 0.0
    %1469 = vmatpush1.msra.mxu0 0.0
    %1470 = vmatprep.subr.mxu0 0.0
    %1471 = vmatpush1.msra.mxu0 0.0
    %1472 = vmatprep.subr.mxu0 0.0
    %1473 = vmatpush1.msra.mxu0 0.0
    %1474 = vmatprep.subr.mxu0 0.0
    %1475 = vmatpush1.msra.mxu0 0.0
    %1476 = vmatprep.subr.mxu0 0.0
    %1477 = vmatpush1.msra.mxu0 0.0
    %1478 = vmatprep.subr.mxu0 0.0
    %1479 = vmatpush1.msra.mxu0 0.0
    %1480 = vmatprep.subr.mxu0 0.0
    %1481 = vmatpush1.msra.mxu0 0.0
    %1482 = vmatprep.subr.mxu0 0.0
    %1483 = vmatpush1.msra.mxu0 0.0
    %1484 = vmatprep.subr.mxu0 0.0
    %1485 = vmatpush1.msra.mxu0 0.0
    %1486 = vmatprep.subr.mxu0 0.0
    %1487 = vmatpush1.msra.mxu0 0.0
    %1488 = vmatprep.subr.mxu0 0.0
    %1489 = vmatpush1.msra.mxu0 0.0
    %1490 = vmatprep.subr.mxu0 0.0
    %1491 = vmatpush1.msra.mxu0 0.0
    %1492 = vmatprep.subr.mxu0 0.0
    %1493 = vmatpush1.msra.mxu0 0.0
    %1494 = vmatprep.subr.mxu0 0.0
    %1495 = vmatpush1.msra.mxu0 0.0
    %1496 = vmatprep.subr.mxu0 0.0
    %1497 = vmatpush1.msra.mxu0 0.0
    %1498 = vmatprep.subr.mxu0 0.0
    %1499 = vmatpush1.msra.mxu0 0.0
    %1500 = vmatprep.subr.mxu0 0.0
    %1501 = vmatpush1.msra.mxu0 0.0
    %1502 = vmatprep.subr.mxu0 0.0
    %1503 = vmatpush1.msra.mxu0 0.0
    %1504 = vmatprep.subr.mxu0 0.0
    %1505 = vmatpush1.msra.mxu0 0.0
    %1506 = vmatprep.subr.mxu0 0.0
    %1507 = vmatpush1.msra.mxu0 0.0
    %1508 = vmatprep.subr.mxu0 0.0
    %1509 = vmatpush1.msra.mxu0 0.0
    %1510 = vmatprep.subr.mxu0 0.0
    %1511 = vmatpush1.msra.mxu0 0.0
    %1512 = vmatprep.subr.mxu0 0.0
    %1513 = vmatpush1.msra.mxu0 0.0
    %1514 = vmatprep.subr.mxu0 0.0
    %1515 = vmatpush1.msra.mxu0 0.0
    %1516 = vmatprep.subr.mxu0 0.0
    %1517 = vmatpush1.msra.mxu0 0.0
    %1518 = vmatprep.subr.mxu0 0.0
    %1519 = vmatpush1.msra.mxu0 0.0
    %1520 = vmatprep.mubr.f32.mxu0 0.0
    %1521 = vmatmul.mubr.f32.gmra.mrb[0].mxu0 %v1300
    %v1522 = vpop.f32.mrb[0].mxu0
    %v1523 = vadd.f32 0.0, %v1522
    %v1524 = vpop.f32.mrb[0].mxu0
    %v1525 = vadd.f32 0.0, %v1524
    %1526 = vdwg.mxu0
    %v1527 = vadd.f32 %v1271, %v1381
    %v1528 = vadd.f32 %v1272, %v1383
    %v1529 = vadd.f32 %v1273, %v1452
    %v1530 = vadd.f32 %v1274, %v1454
    %v1531 = vadd.f32 %v1275, %v1523
    %v1532 = vadd.f32 %v1276, %v1525
    %1533 = vrot.lane.b32.xlu0 %v19, 104
    %v1534 = vpop.permute.xlu0 %1533
    %1535 = vrot.lane.b32.xlu0 %v15, 92
    %v1536 = vpop.permute.xlu0 %1535
    %1537 = vrot.lane.b32.xlu0 %v29, 92
    %v1538 = vpop.permute.xlu0 %1537
    %1539 = vrot.lane.b32.xlu0 %v16, 92
    %v1540 = vpop.permute.xlu0 %1539
    %1541 = vrot.lane.b32.xlu0 %v30, 92
    %v1542 = vpop.permute.xlu0 %1541
    %1543 = vrot.lane.b32.xlu0 %v17, 92
    %v1544 = vpop.permute.xlu0 %1543
    %1545 = vrot.lane.b32.xlu0 %v31, 92
    %v1546 = vpop.permute.xlu0 %1545
    %1547 = vrot.lane.b32.xlu0 %v18, 92
    %v1548 = vpop.permute.xlu0 %1547
    %vm1549 = vcmask 752640
    %v1550 = vsel %vm1549, %v1536, %v1538
    %v1551 = vsel %vm1549, %v1538, %v1540
    %v1552 = vsel %vm1549, %v1540, %v1542
    %v1553 = vsel %vm1549, %v1542, %v1544
    %v1554 = vsel %vm1549, %v1544, %v1546
    %v1555 = vsel %vm1549, %v1546, %v1548
    %v1556 = vsel %vm53, %v1534, 0
    %v1558 = vsel %vm56, %v1550, 0
    %v1560 = vsel %vm56, %v1551, 0
    %v1562 = vsel %vm56, %v1552, 0
    %v1564 = vsel %vm56, %v1553, 0
    %v1566 = vsel %vm56, %v1554, 0
    %v1568 = vsel %vm56, %v1555, 0
    %1570 = vmatprep.subr.mxu0 %v1560
    %1571 = vmatpush1.msra.mxu0 %v1558
    %1572 = vmatprep.subr.mxu0 0.0
    %1573 = vmatpush1.msra.mxu0 0.0
    %1574 = vmatprep.subr.mxu0 0.0
    %1575 = vmatpush1.msra.mxu0 0.0
    %1576 = vmatprep.subr.mxu0 0.0
    %1577 = vmatpush1.msra.mxu0 0.0
    %1578 = vmatprep.subr.mxu0 0.0
    %1579 = vmatpush1.msra.mxu0 0.0
    %1580 = vmatprep.subr.mxu0 0.0
    %1581 = vmatpush1.msra.mxu0 0.0
    %1582 = vmatprep.subr.mxu0 0.0
    %1583 = vmatpush1.msra.mxu0 0.0
    %1584 = vmatprep.subr.mxu0 0.0
    %1585 = vmatpush1.msra.mxu0 0.0
    %1586 = vmatprep.subr.mxu0 0.0
    %1587 = vmatpush1.msra.mxu0 0.0
    %1588 = vmatprep.subr.mxu0 0.0
    %1589 = vmatpush1.msra.mxu0 0.0
    %1590 = vmatprep.subr.mxu0 0.0
    %1591 = vmatpush1.msra.mxu0 0.0
    %1592 = vmatprep.subr.mxu0 0.0
    %1593 = vmatpush1.msra.mxu0 0.0
    %1594 = vmatprep.subr.mxu0 0.0
    %1595 = vmatpush1.msra.mxu0 0.0
    %1596 = vmatprep.subr.mxu0 0.0
    %1597 = vmatpush1.msra.mxu0 0.0
    %1598 = vmatprep.subr.mxu0 0.0
    %1599 = vmatpush1.msra.mxu0 0.0
    %1600 = vmatprep.subr.mxu0 0.0
    %1601 = vmatpush1.msra.mxu0 0.0
    %1602 = vmatprep.subr.mxu0 0.0
    %1603 = vmatpush1.msra.mxu0 0.0
    %1604 = vmatprep.subr.mxu0 0.0
    %1605 = vmatpush1.msra.mxu0 0.0
    %1606 = vmatprep.subr.mxu0 0.0
    %1607 = vmatpush1.msra.mxu0 0.0
    %1608 = vmatprep.subr.mxu0 0.0
    %1609 = vmatpush1.msra.mxu0 0.0
    %1610 = vmatprep.subr.mxu0 0.0
    %1611 = vmatpush1.msra.mxu0 0.0
    %1612 = vmatprep.subr.mxu0 0.0
    %1613 = vmatpush1.msra.mxu0 0.0
    %1614 = vmatprep.subr.mxu0 0.0
    %1615 = vmatpush1.msra.mxu0 0.0
    %1616 = vmatprep.subr.mxu0 0.0
    %1617 = vmatpush1.msra.mxu0 0.0
    %1618 = vmatprep.subr.mxu0 0.0
    %1619 = vmatpush1.msra.mxu0 0.0
    %1620 = vmatprep.subr.mxu0 0.0
    %1621 = vmatpush1.msra.mxu0 0.0
    %1622 = vmatprep.subr.mxu0 0.0
    %1623 = vmatpush1.msra.mxu0 0.0
    %1624 = vmatprep.subr.mxu0 0.0
    %1625 = vmatpush1.msra.mxu0 0.0
    %1626 = vmatprep.subr.mxu0 0.0
    %1627 = vmatpush1.msra.mxu0 0.0
    %1628 = vmatprep.subr.mxu0 0.0
    %1629 = vmatpush1.msra.mxu0 0.0
    %1630 = vmatprep.subr.mxu0 0.0
    %1631 = vmatpush1.msra.mxu0 0.0
    %1632 = vmatprep.subr.mxu0 0.0
    %1633 = vmatpush1.msra.mxu0 0.0
    %1634 = vmatprep.mubr.f32.mxu0 0.0
    %1635 = vmatmul.mubr.f32.gmra.mrb[0].mxu0 %v1556
    %v1636 = vpop.f32.mrb[0].mxu0
    %v1637 = vadd.f32 0.0, %v1636
    %v1638 = vpop.f32.mrb[0].mxu0
    %v1639 = vadd.f32 0.0, %v1638
    %1640 = vdwg.mxu0
    %1641 = vmatprep.subr.mxu0 %v1564
    %1642 = vmatpush1.msra.mxu0 %v1562
    %1643 = vmatprep.subr.mxu0 0.0
    %1644 = vmatpush1.msra.mxu0 0.0
    %1645 = vmatprep.subr.mxu0 0.0
    %1646 = vmatpush1.msra.mxu0 0.0
    %1647 = vmatprep.subr.mxu0 0.0
    %1648 = vmatpush1.msra.mxu0 0.0
    %1649 = vmatprep.subr.mxu0 0.0
    %1650 = vmatpush1.msra.mxu0 0.0
    %1651 = vmatprep.subr.mxu0 0.0
    %1652 = vmatpush1.msra.mxu0 0.0
    %1653 = vmatprep.subr.mxu0 0.0
    %1654 = vmatpush1.msra.mxu0 0.0
    %1655 = vmatprep.subr.mxu0 0.0
    %1656 = vmatpush1.msra.mxu0 0.0
    %1657 = vmatprep.subr.mxu0 0.0
    %1658 = vmatpush1.msra.mxu0 0.0
    %1659 = vmatprep.subr.mxu0 0.0
    %1660 = vmatpush1.msra.mxu0 0.0
    %1661 = vmatprep.subr.mxu0 0.0
    %1662 = vmatpush1.msra.mxu0 0.0
    %1663 = vmatprep.subr.mxu0 0.0
    %1664 = vmatpush1.msra.mxu0 0.0
    %1665 = vmatprep.subr.mxu0 0.0
    %1666 = vmatpush1.msra.mxu0 0.0
    %1667 = vmatprep.subr.mxu0 0.0
    %1668 = vmatpush1.msra.mxu0 0.0
    %1669 = vmatprep.subr.mxu0 0.0
    %1670 = vmatpush1.msra.mxu0 0.0
    %1671 = vmatprep.subr.mxu0 0.0
    %1672 = vmatpush1.msra.mxu0 0.0
    %1673 = vmatprep.subr.mxu0 0.0
    %1674 = vmatpush1.msra.mxu0 0.0
    %1675 = vmatprep.subr.mxu0 0.0
    %1676 = vmatpush1.msra.mxu0 0.0
    %1677 = vmatprep.subr.mxu0 0.0
    %1678 = vmatpush1.msra.mxu0 0.0
    %1679 = vmatprep.subr.mxu0 0.0
    %1680 = vmatpush1.msra.mxu0 0.0
    %1681 = vmatprep.subr.mxu0 0.0
    %1682 = vmatpush1.msra.mxu0 0.0
    %1683 = vmatprep.subr.mxu0 0.0
    %1684 = vmatpush1.msra.mxu0 0.0
    %1685 = vmatprep.subr.mxu0 0.0
    %1686 = vmatpush1.msra.mxu0 0.0
    %1687 = vmatprep.subr.mxu0 0.0
    %1688 = vmatpush1.msra.mxu0 0.0
    %1689 = vmatprep.subr.mxu0 0.0
    %1690 = vmatpush1.msra.mxu0 0.0
    %1691 = vmatprep.subr.mxu0 0.0
    %1692 = vmatpush1.msra.mxu0 0.0
    %1693 = vmatprep.subr.mxu0 0.0
    %1694 = vmatpush1.msra.mxu0 0.0
    %1695 = vmatprep.subr.mxu0 0.0
    %1696 = vmatpush1.msra.mxu0 0.0
    %1697 = vmatprep.subr.mxu0 0.0
    %1698 = vmatpush1.msra.mxu0 0.0
    %1699 = vmatprep.subr.mxu0 0.0
    %1700 = vmatpush1.msra.mxu0 0.0
    %1701 = vmatprep.subr.mxu0 0.0
    %1702 = vmatpush1.msra.mxu0 0.0
    %1703 = vmatprep.subr.mxu0 0.0
    %1704 = vmatpush1.msra.mxu0 0.0
    %1705 = vmatprep.mubr.f32.mxu0 0.0
    %1706 = vmatmul.mubr.f32.gmra.mrb[0].mxu0 %v1556
    %v1707 = vpop.f32.mrb[0].mxu0
    %v1708 = vadd.f32 0.0, %v1707
    %v1709 = vpop.f32.mrb[0].mxu0
    %v1710 = vadd.f32 0.0, %v1709
    %1711 = vdwg.mxu0
    %1712 = vmatprep.subr.mxu0 %v1568
    %1713 = vmatpush1.msra.mxu0 %v1566
    %1714 = vmatprep.subr.mxu0 0.0
    %1715 = vmatpush1.msra.mxu0 0.0
    %1716 = vmatprep.subr.mxu0 0.0
    %1717 = vmatpush1.msra.mxu0 0.0
    %1718 = vmatprep.subr.mxu0 0.0
    %1719 = vmatpush1.msra.mxu0 0.0
    %1720 = vmatprep.subr.mxu0 0.0
    %1721 = vmatpush1.msra.mxu0 0.0
    %1722 = vmatprep.subr.mxu0 0.0
    %1723 = vmatpush1.msra.mxu0 0.0
    %1724 = vmatprep.subr.mxu0 0.0
    %1725 = vmatpush1.msra.mxu0 0.0
    %1726 = vmatprep.subr.mxu0 0.0
    %1727 = vmatpush1.msra.mxu0 0.0
    %1728 = vmatprep.subr.mxu0 0.0
    %1729 = vmatpush1.msra.mxu0 0.0
    %1730 = vmatprep.subr.mxu0 0.0
    %1731 = vmatpush1.msra.mxu0 0.0
    %1732 = vmatprep.subr.mxu0 0.0
    %1733 = vmatpush1.msra.mxu0 0.0
    %1734 = vmatprep.subr.mxu0 0.0
    %1735 = vmatpush1.msra.mxu0 0.0
    %1736 = vmatprep.subr.mxu0 0.0
    %1737 = vmatpush1.msra.mxu0 0.0
    %1738 = vmatprep.subr.mxu0 0.0
    %1739 = vmatpush1.msra.mxu0 0.0
    %1740 = vmatprep.subr.mxu0 0.0
    %1741 = vmatpush1.msra.mxu0 0.0
    %1742 = vmatprep.subr.mxu0 0.0
    %1743 = vmatpush1.msra.mxu0 0.0
    %1744 = vmatprep.subr.mxu0 0.0
    %1745 = vmatpush1.msra.mxu0 0.0
    %1746 = vmatprep.subr.mxu0 0.0
    %1747 = vmatpush1.msra.mxu0 0.0
    %1748 = vmatprep.subr.mxu0 0.0
    %1749 = vmatpush1.msra.mxu0 0.0
    %1750 = vmatprep.subr.mxu0 0.0
    %1751 = vmatpush1.msra.mxu0 0.0
    %1752 = vmatprep.subr.mxu0 0.0
    %1753 = vmatpush1.msra.mxu0 0.0
    %1754 = vmatprep.subr.mxu0 0.0
    %1755 = vmatpush1.msra.mxu0 0.0
    %1756 = vmatprep.subr.mxu0 0.0
    %1757 = vmatpush1.msra.mxu0 0.0
    %1758 = vmatprep.subr.mxu0 0.0
    %1759 = vmatpush1.msra.mxu0 0.0
    %1760 = vmatprep.subr.mxu0 0.0
    %1761 = vmatpush1.msra.mxu0 0.0
    %1762 = vmatprep.subr.mxu0 0.0
    %1763 = vmatpush1.msra.mxu0 0.0
    %1764 = vmatprep.subr.mxu0 0.0
    %1765 = vmatpush1.msra.mxu0 0.0
    %1766 = vmatprep.subr.mxu0 0.0
    %1767 = vmatpush1.msra.mxu0 0.0
    %1768 = vmatprep.subr.mxu0 0.0
    %1769 = vmatpush1.msra.mxu0 0.0
    %1770 = vmatprep.subr.mxu0 0.0
    %1771 = vmatpush1.msra.mxu0 0.0
    %1772 = vmatprep.subr.mxu0 0.0
    %1773 = vmatpush1.msra.mxu0 0.0
    %1774 = vmatprep.subr.mxu0 0.0
    %1775 = vmatpush1.msra.mxu0 0.0
    %1776 = vmatprep.mubr.f32.mxu0 0.0
    %1777 = vmatmul.mubr.f32.gmra.mrb[0].mxu0 %v1556
    %v1778 = vpop.f32.mrb[0].mxu0
    %v1779 = vadd.f32 0.0, %v1778
    %v1780 = vpop.f32.mrb[0].mxu0
    %v1781 = vadd.f32 0.0, %v1780
    %1782 = vdwg.mxu0
    %v1783 = vadd.f32 %v1527, %v1637
    %v1784 = vadd.f32 %v1528, %v1639
    %v1785 = vadd.f32 %v1529, %v1708
    %v1786 = vadd.f32 %v1530, %v1710
    %v1787 = vadd.f32 %v1531, %v1779
    %v1788 = vadd.f32 %v1532, %v1781
    %1789 = vrot.lane.b32.xlu0 %v19, 100
    %v1790 = vpop.permute.xlu0 %1789
    %1791 = vrot.lane.b32.xlu0 %v15, 91
    %v1792 = vpop.permute.xlu0 %1791
    %1793 = vrot.lane.b32.xlu0 %v29, 91
    %v1794 = vpop.permute.xlu0 %1793
    %1795 = vrot.lane.b32.xlu0 %v16, 91
    %v1796 = vpop.permute.xlu0 %1795
    %1797 = vrot.lane.b32.xlu0 %v30, 91
    %v1798 = vpop.permute.xlu0 %1797
    %1799 = vrot.lane.b32.xlu0 %v17, 91
    %v1800 = vpop.permute.xlu0 %1799
    %1801 = vrot.lane.b32.xlu0 %v31, 91
    %v1802 = vpop.permute.xlu0 %1801
    %1803 = vrot.lane.b32.xlu0 %v18, 91
    %v1804 = vpop.permute.xlu0 %1803
    %vm1805 = vcmask 744448
    %v1806 = vsel %vm1805, %v1792, %v1794
    %v1807 = vsel %vm1805, %v1794, %v1796
    %v1808 = vsel %vm1805, %v1796, %v1798
    %v1809 = vsel %vm1805, %v1798, %v1800
    %v1810 = vsel %vm1805, %v1800, %v1802
    %v1811 = vsel %vm1805, %v1802, %v1804
    %v1812 = vsel %vm53, %v1790, 0
    %v1814 = vsel %vm56, %v1806, 0
    %v1816 = vsel %vm56, %v1807, 0
    %v1818 = vsel %vm56, %v1808, 0
    %v1820 = vsel %vm56, %v1809, 0
    %v1822 = vsel %vm56, %v1810, 0
    %v1824 = vsel %vm56, %v1811, 0
    %1826 = vmatprep.subr.mxu0 %v1816
    %1827 = vmatpush1.msra.mxu0 %v1814
    %1828 = vmatprep.subr.mxu0 0.0
    %1829 = vmatpush1.msra.mxu0 0.0
    %1830 = vmatprep.subr.mxu0 0.0
    %1831 = vmatpush1.msra.mxu0 0.0
    %1832 = vmatprep.subr.mxu0 0.0
    %1833 = vmatpush1.msra.mxu0 0.0
    %1834 = vmatprep.subr.mxu0 0.0
    %1835 = vmatpush1.msra.mxu0 0.0
    %1836 = vmatprep.subr.mxu0 0.0
    %1837 = vmatpush1.msra.mxu0 0.0
    %1838 = vmatprep.subr.mxu0 0.0
    %1839 = vmatpush1.msra.mxu0 0.0
    %1840 = vmatprep.subr.mxu0 0.0
    %1841 = vmatpush1.msra.mxu0 0.0
    %1842 = vmatprep.subr.mxu0 0.0
    %1843 = vmatpush1.msra.mxu0 0.0
    %1844 = vmatprep.subr.mxu0 0.0
    %1845 = vmatpush1.msra.mxu0 0.0
    %1846 = vmatprep.subr.mxu0 0.0
    %1847 = vmatpush1.msra.mxu0 0.0
    %1848 = vmatprep.subr.mxu0 0.0
    %1849 = vmatpush1.msra.mxu0 0.0
    %1850 = vmatprep.subr.mxu0 0.0
    %1851 = vmatpush1.msra.mxu0 0.0
    %1852 = vmatprep.subr.mxu0 0.0
    %1853 = vmatpush1.msra.mxu0 0.0
    %1854 = vmatprep.subr.mxu0 0.0
    %1855 = vmatpush1.msra.mxu0 0.0
    %1856 = vmatprep.subr.mxu0 0.0
    %1857 = vmatpush1.msra.mxu0 0.0
    %1858 = vmatprep.subr.mxu0 0.0
    %1859 = vmatpush1.msra.mxu0 0.0
    %1860 = vmatprep.subr.mxu0 0.0
    %1861 = vmatpush1.msra.mxu0 0.0
    %1862 = vmatprep.subr.mxu0 0.0
    %1863 = vmatpush1.msra.mxu0 0.0
    %1864 = vmatprep.subr.mxu0 0.0
    %1865 = vmatpush1.msra.mxu0 0.0
    %1866 = vmatprep.subr.mxu0 0.0
    %1867 = vmatpush1.msra.mxu0 0.0
    %1868 = vmatprep.subr.mxu0 0.0
    %1869 = vmatpush1.msra.mxu0 0.0
    %1870 = vmatprep.subr.mxu0 0.0
    %1871 = vmatpush1.msra.mxu0 0.0
    %1872 = vmatprep.subr.mxu0 0.0
    %1873 = vmatpush1.msra.mxu0 0.0
    %1874 = vmatprep.subr.mxu0 0.0
    %1875 = vmatpush1.msra.mxu0 0.0
    %1876 = vmatprep.subr.mxu0 0.0
    %1877 = vmatpush1.msra.mxu0 0.0
    %1878 = vmatprep.subr.mxu0 0.0
    %1879 = vmatpush1.msra.mxu0 0.0
    %1880 = vmatprep.subr.mxu0 0.0
    %1881 = vmatpush1.msra.mxu0 0.0
    %1882 = vmatprep.subr.mxu0 0.0
    %1883 = vmatpush1.msra.mxu0 0.0
    %1884 = vmatprep.subr.mxu0 0.0
    %1885 = vmatpush1.msra.mxu0 0.0
    %1886 = vmatprep.subr.mxu0 0.0
    %1887 = vmatpush1.msra.mxu0 0.0
    %1888 = vmatprep.subr.mxu0 0.0
    %1889 = vmatpush1.msra.mxu0 0.0
    %1890 = vmatprep.mubr.f32.mxu0 0.0
    %1891 = vmatmul.mubr.f32.gmra.mrb[0].mxu0 %v1812
    %v1892 = vpop.f32.mrb[0].mxu0
    %v1893 = vadd.f32 0.0, %v1892
    %v1894 = vpop.f32.mrb[0].mxu0
    %v1895 = vadd.f32 0.0, %v1894
    %1896 = vdwg.mxu0
    %1897 = vmatprep.subr.mxu0 %v1820
    %1898 = vmatpush1.msra.mxu0 %v1818
    %1899 = vmatprep.subr.mxu0 0.0
    %1900 = vmatpush1.msra.mxu0 0.0
    %1901 = vmatprep.subr.mxu0 0.0
    %1902 = vmatpush1.msra.mxu0 0.0
    %1903 = vmatprep.subr.mxu0 0.0
    %1904 = vmatpush1.msra.mxu0 0.0
    %1905 = vmatprep.subr.mxu0 0.0
    %1906 = vmatpush1.msra.mxu0 0.0
    %1907 = vmatprep.subr.mxu0 0.0
    %1908 = vmatpush1.msra.mxu0 0.0
    %1909 = vmatprep.subr.mxu0 0.0
    %1910 = vmatpush1.msra.mxu0 0.0
    %1911 = vmatprep.subr.mxu0 0.0
    %1912 = vmatpush1.msra.mxu0 0.0
    %1913 = vmatprep.subr.mxu0 0.0
    %1914 = vmatpush1.msra.mxu0 0.0
    %1915 = vmatprep.subr.mxu0 0.0
    %1916 = vmatpush1.msra.mxu0 0.0
    %1917 = vmatprep.subr.mxu0 0.0
    %1918 = vmatpush1.msra.mxu0 0.0
    %1919 = vmatprep.subr.mxu0 0.0
    %1920 = vmatpush1.msra.mxu0 0.0
    %1921 = vmatprep.subr.mxu0 0.0
    %1922 = vmatpush1.msra.mxu0 0.0
    %1923 = vmatprep.subr.mxu0 0.0
    %1924 = vmatpush1.msra.mxu0 0.0
    %1925 = vmatprep.subr.mxu0 0.0
    %1926 = vmatpush1.msra.mxu0 0.0
    %1927 = vmatprep.subr.mxu0 0.0
    %1928 = vmatpush1.msra.mxu0 0.0
    %1929 = vmatprep.subr.mxu0 0.0
    %1930 = vmatpush1.msra.mxu0 0.0
    %1931 = vmatprep.subr.mxu0 0.0
    %1932 = vmatpush1.msra.mxu0 0.0
    %1933 = vmatprep.subr.mxu0 0.0
    %1934 = vmatpush1.msra.mxu0 0.0
    %1935 = vmatprep.subr.mxu0 0.0
    %1936 = vmatpush1.msra.mxu0 0.0
    %1937 = vmatprep.subr.mxu0 0.0
    %1938 = vmatpush1.msra.mxu0 0.0
    %1939 = vmatprep.subr.mxu0 0.0
    %1940 = vmatpush1.msra.mxu0 0.0
    %1941 = vmatprep.subr.mxu0 0.0
    %1942 = vmatpush1.msra.mxu0 0.0
    %1943 = vmatprep.subr.mxu0 0.0
    %1944 = vmatpush1.msra.mxu0 0.0
    %1945 = vmatprep.subr.mxu0 0.0
    %1946 = vmatpush1.msra.mxu0 0.0
    %1947 = vmatprep.subr.mxu0 0.0
    %1948 = vmatpush1.msra.mxu0 0.0
    %1949 = vmatprep.subr.mxu0 0.0
    %1950 = vmatpush1.msra.mxu0 0.0
    %1951 = vmatprep.subr.mxu0 0.0
    %1952 = vmatpush1.msra.mxu0 0.0
    %1953 = vmatprep.subr.mxu0 0.0
    %1954 = vmatpush1.msra.mxu0 0.0
    %1955 = vmatprep.subr.mxu0 0.0
    %1956 = vmatpush1.msra.mxu0 0.0
    %1957 = vmatprep.subr.mxu0 0.0
    %1958 = vmatpush1.msra.mxu0 0.0
    %1959 = vmatprep.subr.mxu0 0.0
    %1960 = vmatpush1.msra.mxu0 0.0
    %1961 = vmatprep.mubr.f32.mxu0 0.0
    %1962 = vmatmul.mubr.f32.gmra.mrb[0].mxu0 %v1812
    %v1963 = vpop.f32.mrb[0].mxu0
    %v1964 = vadd.f32 0.0, %v1963
    %v1965 = vpop.f32.mrb[0].mxu0
    %v1966 = vadd.f32 0.0, %v1965
    %1967 = vdwg.mxu0
    %1968 = vmatprep.subr.mxu0 %v1824
    %1969 = vmatpush1.msra.mxu0 %v1822
    %1970 = vmatprep.subr.mxu0 0.0
    %1971 = vmatpush1.msra.mxu0 0.0
    %1972 = vmatprep.subr.mxu0 0.0
    %1973 = vmatpush1.msra.mxu0 0.0
    %1974 = vmatprep.subr.mxu0 0.0
    %1975 = vmatpush1.msra.mxu0 0.0
    %1976 = vmatprep.subr.mxu0 0.0
    %1977 = vmatpush1.msra.mxu0 0.0
    %1978 = vmatprep.subr.mxu0 0.0
    %1979 = vmatpush1.msra.mxu0 0.0
    %1980 = vmatprep.subr.mxu0 0.0
    %1981 = vmatpush1.msra.mxu0 0.0
    %1982 = vmatprep.subr.mxu0 0.0
    %1983 = vmatpush1.msra.mxu0 0.0
    %1984 = vmatprep.subr.mxu0 0.0
    %1985 = vmatpush1.msra.mxu0 0.0
    %1986 = vmatprep.subr.mxu0 0.0
    %1987 = vmatpush1.msra.mxu0 0.0
    %1988 = vmatprep.subr.mxu0 0.0
    %1989 = vmatpush1.msra.mxu0 0.0
    %1990 = vmatprep.subr.mxu0 0.0
    %1991 = vmatpush1.msra.mxu0 0.0
    %1992 = vmatprep.subr.mxu0 0.0
    %1993 = vmatpush1.msra.mxu0 0.0
    %1994 = vmatprep.subr.mxu0 0.0
    %1995 = vmatpush1.msra.mxu0 0.0
    %1996 = vmatprep.subr.mxu0 0.0
    %1997 = vmatpush1.msra.mxu0 0.0
    %1998 = vmatprep.subr.mxu0 0.0
    %1999 = vmatpush1.msra.mxu0 0.0
    %2000 = vmatprep.subr.mxu0 0.0
    %2001 = vmatpush1.msra.mxu0 0.0
    %2002 = vmatprep.subr.mxu0 0.0
    %2003 = vmatpush1.msra.mxu0 0.0
    %2004 = vmatprep.subr.mxu0 0.0
    %2005 = vmatpush1.msra.mxu0 0.0
    %2006 = vmatprep.subr.mxu0 0.0
    %2007 = vmatpush1.msra.mxu0 0.0
    %2008 = vmatprep.subr.mxu0 0.0
    %2009 = vmatpush1.msra.mxu0 0.0
    %2010 = vmatprep.subr.mxu0 0.0
    %2011 = vmatpush1.msra.mxu0 0.0
    %2012 = vmatprep.subr.mxu0 0.0
    %2013 = vmatpush1.msra.mxu0 0.0
    %2014 = vmatprep.subr.mxu0 0.0
    %2015 = vmatpush1.msra.mxu0 0.0
    %2016 = vmatprep.subr.mxu0 0.0
    %2017 = vmatpush1.msra.mxu0 0.0
    %2018 = vmatprep.subr.mxu0 0.0
    %2019 = vmatpush1.msra.mxu0 0.0
    %2020 = vmatprep.subr.mxu0 0.0
    %2021 = vmatpush1.msra.mxu0 0.0
    %2022 = vmatprep.subr.mxu0 0.0
    %2023 = vmatpush1.msra.mxu0 0.0
    %2024 = vmatprep.subr.mxu0 0.0
    %2025 = vmatpush1.msra.mxu0 0.0
    %2026 = vmatprep.subr.mxu0 0.0
    %2027 = vmatpush1.msra.mxu0 0.0
    %2028 = vmatprep.subr.mxu0 0.0
    %2029 = vmatpush1.msra.mxu0 0.0
    %2030 = vmatprep.subr.mxu0 0.0
    %2031 = vmatpush1.msra.mxu0 0.0
    %2032 = vmatprep.mubr.f32.mxu0 0.0
    %2033 = vmatmul.mubr.f32.gmra.mrb[0].mxu0 %v1812
    %v2034 = vpop.f32.mrb[0].mxu0
    %v2035 = vadd.f32 0.0, %v2034
    %v2036 = vpop.f32.mrb[0].mxu0
    %v2037 = vadd.f32 0.0, %v2036
    %2038 = vdwg.mxu0
    %v2039 = vadd.f32 %v1783, %v1893
    %v2040 = vadd.f32 %v1784, %v1895
    %v2041 = vadd.f32 %v1785, %v1964
    %v2042 = vadd.f32 %v1786, %v1966
    %v2043 = vadd.f32 %v1787, %v2035
    %v2044 = vadd.f32 %v1788, %v2037
    %2045 = vrot.lane.b32.xlu0 %v19, 96
    %v2046 = vpop.permute.xlu0 %2045
    %2047 = vrot.lane.b32.xlu0 %v15, 90
    %v2048 = vpop.permute.xlu0 %2047
    %2049 = vrot.lane.b32.xlu0 %v29, 90
    %v2050 = vpop.permute.xlu0 %2049
    %2051 = vrot.lane.b32.xlu0 %v16, 90
    %v2052 = vpop.permute.xlu0 %2051
    %2053 = vrot.lane.b32.xlu0 %v30, 90
    %v2054 = vpop.permute.xlu0 %2053
    %2055 = vrot.lane.b32.xlu0 %v17, 90
    %v2056 = vpop.permute.xlu0 %2055
    %2057 = vrot.lane.b32.xlu0 %v31, 90
    %v2058 = vpop.permute.xlu0 %2057
    %2059 = vrot.lane.b32.xlu0 %v18, 90
    %v2060 = vpop.permute.xlu0 %2059
    %vm2061 = vcmask 736256
    %v2062 = vsel %vm2061, %v2048, %v2050
    %v2063 = vsel %vm2061, %v2050, %v2052
    %v2064 = vsel %vm2061, %v2052, %v2054
    %v2065 = vsel %vm2061, %v2054, %v2056
    %v2066 = vsel %vm2061, %v2056, %v2058
    %v2067 = vsel %vm2061, %v2058, %v2060
    %v2068 = vsel %vm53, %v2046, 0
    %v2070 = vsel %vm56, %v2062, 0
    %v2072 = vsel %vm56, %v2063, 0
    %v2074 = vsel %vm56, %v2064, 0
    %v2076 = vsel %vm56, %v2065, 0
    %v2078 = vsel %vm56, %v2066, 0
    %v2080 = vsel %vm56, %v2067, 0
    %2082 = vmatprep.subr.mxu0 %v2072
    %2083 = vmatpush1.msra.mxu0 %v2070
    %2084 = vmatprep.subr.mxu0 0.0
    %2085 = vmatpush1.msra.mxu0 0.0
    %2086 = vmatprep.subr.mxu0 0.0
    %2087 = vmatpush1.msra.mxu0 0.0
    %2088 = vmatprep.subr.mxu0 0.0
    %2089 = vmatpush1.msra.mxu0 0.0
    %2090 = vmatprep.subr.mxu0 0.0
    %2091 = vmatpush1.msra.mxu0 0.0
    %2092 = vmatprep.subr.mxu0 0.0
    %2093 = vmatpush1.msra.mxu0 0.0
    %2094 = vmatprep.subr.mxu0 0.0
    %2095 = vmatpush1.msra.mxu0 0.0
    %2096 = vmatprep.subr.mxu0 0.0
    %2097 = vmatpush1.msra.mxu0 0.0
    %2098 = vmatprep.subr.mxu0 0.0
    %2099 = vmatpush1.msra.mxu0 0.0
    %2100 = vmatprep.subr.mxu0 0.0
    %2101 = vmatpush1.msra.mxu0 0.0
    %2102 = vmatprep.subr.mxu0 0.0
    %2103 = vmatpush1.msra.mxu0 0.0
    %2104 = vmatprep.subr.mxu0 0.0
    %2105 = vmatpush1.msra.mxu0 0.0
    %2106 = vmatprep.subr.mxu0 0.0
    %2107 = vmatpush1.msra.mxu0 0.0
    %2108 = vmatprep.subr.mxu0 0.0
    %2109 = vmatpush1.msra.mxu0 0.0
    %2110 = vmatprep.subr.mxu0 0.0
    %2111 = vmatpush1.msra.mxu0 0.0
    %2112 = vmatprep.subr.mxu0 0.0
    %2113 = vmatpush1.msra.mxu0 0.0
    %2114 = vmatprep.subr.mxu0 0.0
    %2115 = vmatpush1.msra.mxu0 0.0
    %2116 = vmatprep.subr.mxu0 0.0
    %2117 = vmatpush1.msra.mxu0 0.0
    %2118 = vmatprep.subr.mxu0 0.0
    %2119 = vmatpush1.msra.mxu0 0.0
    %2120 = vmatprep.subr.mxu0 0.0
    %2121 = vmatpush1.msra.mxu0 0.0
    %2122 = vmatprep.subr.mxu0 0.0
    %2123 = vmatpush1.msra.mxu0 0.0
    %2124 = vmatprep.subr.mxu0 0.0
    %2125 = vmatpush1.msra.mxu0 0.0
    %2126 = vmatprep.subr.mxu0 0.0
    %2127 = vmatpush1.msra.mxu0 0.0
    %2128 = vmatprep.subr.mxu0 0.0
    %2129 = vmatpush1.msra.mxu0 0.0
    %2130 = vmatprep.subr.mxu0 0.0
    %2131 = vmatpush1.msra.mxu0 0.0
    %2132 = vmatprep.subr.mxu0 0.0
    %2133 = vmatpush1.msra.mxu0 0.0
    %2134 = vmatprep.subr.mxu0 0.0
    %2135 = vmatpush1.msra.mxu0 0.0
    %2136 = vmatprep.subr.mxu0 0.0
    %2137 = vmatpush1.msra.mxu0 0.0
    %2138 = vmatprep.subr.mxu0 0.0
    %2139 = vmatpush1.msra.mxu0 0.0
    %2140 = vmatprep.subr.mxu0 0.0
    %2141 = vmatpush1.msra.mxu0 0.0
    %2142 = vmatprep.subr.mxu0 0.0
    %2143 = vmatpush1.msra.mxu0 0.0
    %2144 = vmatprep.subr.mxu0 0.0
    %2145 = vmatpush1.msra.mxu0 0.0
    %2146 = vmatprep.mubr.f32.mxu0 0.0
    %2147 = vmatmul.mubr.f32.gmra.mrb[0].mxu0 %v2068
    %v2148 = vpop.f32.mrb[0].mxu0
    %v2149 = vadd.f32 0.0, %v2148
    %v2150 = vpop.f32.mrb[0].mxu0
    %v2151 = vadd.f32 0.0, %v2150
    %2152 = vdwg.mxu0
    %2153 = vmatprep.subr.mxu0 %v2076
    %2154 = vmatpush1.msra.mxu0 %v2074
    %2155 = vmatprep.subr.mxu0 0.0
    %2156 = vmatpush1.msra.mxu0 0.0
    %2157 = vmatprep.subr.mxu0 0.0
    %2158 = vmatpush1.msra.mxu0 0.0
    %2159 = vmatprep.subr.mxu0 0.0
    %2160 = vmatpush1.msra.mxu0 0.0
    %2161 = vmatprep.subr.mxu0 0.0
    %2162 = vmatpush1.msra.mxu0 0.0
    %2163 = vmatprep.subr.mxu0 0.0
    %2164 = vmatpush1.msra.mxu0 0.0
    %2165 = vmatprep.subr.mxu0 0.0
    %2166 = vmatpush1.msra.mxu0 0.0
    %2167 = vmatprep.subr.mxu0 0.0
    %2168 = vmatpush1.msra.mxu0 0.0
    %2169 = vmatprep.subr.mxu0 0.0
    %2170 = vmatpush1.msra.mxu0 0.0
    %2171 = vmatprep.subr.mxu0 0.0
    %2172 = vmatpush1.msra.mxu0 0.0
    %2173 = vmatprep.subr.mxu0 0.0
    %2174 = vmatpush1.msra.mxu0 0.0
    %2175 = vmatprep.subr.mxu0 0.0
    %2176 = vmatpush1.msra.mxu0 0.0
    %2177 = vmatprep.subr.mxu0 0.0
    %2178 = vmatpush1.msra.mxu0 0.0
    %2179 = vmatprep.subr.mxu0 0.0
    %2180 = vmatpush1.msra.mxu0 0.0
    %2181 = vmatprep.subr.mxu0 0.0
    %2182 = vmatpush1.msra.mxu0 0.0
    %2183 = vmatprep.subr.mxu0 0.0
    %2184 = vmatpush1.msra.mxu0 0.0
    %2185 = vmatprep.subr.mxu0 0.0
    %2186 = vmatpush1.msra.mxu0 0.0
    %2187 = vmatprep.subr.mxu0 0.0
    %2188 = vmatpush1.msra.mxu0 0.0
    %2189 = vmatprep.subr.mxu0 0.0
    %2190 = vmatpush1.msra.mxu0 0.0
    %2191 = vmatprep.subr.mxu0 0.0
    %2192 = vmatpush1.msra.mxu0 0.0
    %2193 = vmatprep.subr.mxu0 0.0
    %2194 = vmatpush1.msra.mxu0 0.0
    %2195 = vmatprep.subr.mxu0 0.0
    %2196 = vmatpush1.msra.mxu0 0.0
    %2197 = vmatprep.subr.mxu0 0.0
    %2198 = vmatpush1.msra.mxu0 0.0
    %2199 = vmatprep.subr.mxu0 0.0
    %2200 = vmatpush1.msra.mxu0 0.0
    %2201 = vmatprep.subr.mxu0 0.0
    %2202 = vmatpush1.msra.mxu0 0.0
    %2203 = vmatprep.subr.mxu0 0.0
    %2204 = vmatpush1.msra.mxu0 0.0
    %2205 = vmatprep.subr.mxu0 0.0
    %2206 = vmatpush1.msra.mxu0 0.0
    %2207 = vmatprep.subr.mxu0 0.0
    %2208 = vmatpush1.msra.mxu0 0.0
    %2209 = vmatprep.subr.mxu0 0.0
    %2210 = vmatpush1.msra.mxu0 0.0
    %2211 = vmatprep.subr.mxu0 0.0
    %2212 = vmatpush1.msra.mxu0 0.0
    %2213 = vmatprep.subr.mxu0 0.0
    %2214 = vmatpush1.msra.mxu0 0.0
    %2215 = vmatprep.subr.mxu0 0.0
    %2216 = vmatpush1.msra.mxu0 0.0
    %2217 = vmatprep.mubr.f32.mxu0 0.0
    %2218 = vmatmul.mubr.f32.gmra.mrb[0].mxu0 %v2068
    %v2219 = vpop.f32.mrb[0].mxu0
    %v2220 = vadd.f32 0.0, %v2219
    %v2221 = vpop.f32.mrb[0].mxu0
    %v2222 = vadd.f32 0.0, %v2221
    %2223 = vdwg.mxu0
    %2224 = vmatprep.subr.mxu0 %v2080
    %2225 = vmatpush1.msra.mxu0 %v2078
    %2226 = vmatprep.subr.mxu0 0.0
    %2227 = vmatpush1.msra.mxu0 0.0
    %2228 = vmatprep.subr.mxu0 0.0
    %2229 = vmatpush1.msra.mxu0 0.0
    %2230 = vmatprep.subr.mxu0 0.0
    %2231 = vmatpush1.msra.mxu0 0.0
    %2232 = vmatprep.subr.mxu0 0.0
    %2233 = vmatpush1.msra.mxu0 0.0
    %2234 = vmatprep.subr.mxu0 0.0
    %2235 = vmatpush1.msra.mxu0 0.0
    %2236 = vmatprep.subr.mxu0 0.0
    %2237 = vmatpush1.msra.mxu0 0.0
    %2238 = vmatprep.subr.mxu0 0.0
    %2239 = vmatpush1.msra.mxu0 0.0
    %2240 = vmatprep.subr.mxu0 0.0
    %2241 = vmatpush1.msra.mxu0 0.0
    %2242 = vmatprep.subr.mxu0 0.0
    %2243 = vmatpush1.msra.mxu0 0.0
    %2244 = vmatprep.subr.mxu0 0.0
    %2245 = vmatpush1.msra.mxu0 0.0
    %2246 = vmatprep.subr.mxu0 0.0
    %2247 = vmatpush1.msra.mxu0 0.0
    %2248 = vmatprep.subr.mxu0 0.0
    %2249 = vmatpush1.msra.mxu0 0.0
    %2250 = vmatprep.subr.mxu0 0.0
    %2251 = vmatpush1.msra.mxu0 0.0
    %2252 = vmatprep.subr.mxu0 0.0
    %2253 = vmatpush1.msra.mxu0 0.0
    %2254 = vmatprep.subr.mxu0 0.0
    %2255 = vmatpush1.msra.mxu0 0.0
    %2256 = vmatprep.subr.mxu0 0.0
    %2257 = vmatpush1.msra.mxu0 0.0
    %2258 = vmatprep.subr.mxu0 0.0
    %2259 = vmatpush1.msra.mxu0 0.0
    %2260 = vmatprep.subr.mxu0 0.0
    %2261 = vmatpush1.msra.mxu0 0.0
    %2262 = vmatprep.subr.mxu0 0.0
    %2263 = vmatpush1.msra.mxu0 0.0
    %2264 = vmatprep.subr.mxu0 0.0
    %2265 = vmatpush1.msra.mxu0 0.0
    %2266 = vmatprep.subr.mxu0 0.0
    %2267 = vmatpush1.msra.mxu0 0.0
    %2268 = vmatprep.subr.mxu0 0.0
    %2269 = vmatpush1.msra.mxu0 0.0
    %2270 = vmatprep.subr.mxu0 0.0
    %2271 = vmatpush1.msra.mxu0 0.0
    %2272 = vmatprep.subr.mxu0 0.0
    %2273 = vmatpush1.msra.mxu0 0.0
    %2274 = vmatprep.subr.mxu0 0.0
    %2275 = vmatpush1.msra.mxu0 0.0
    %2276 = vmatprep.subr.mxu0 0.0
    %2277 = vmatpush1.msra.mxu0 0.0
    %2278 = vmatprep.subr.mxu0 0.0
    %2279 = vmatpush1.msra.mxu0 0.0
    %2280 = vmatprep.subr.mxu0 0.0
    %2281 = vmatpush1.msra.mxu0 0.0
    %2282 = vmatprep.subr.mxu0 0.0
    %2283 = vmatpush1.msra.mxu0 0.0
    %2284 = vmatprep.subr.mxu0 0.0
    %2285 = vmatpush1.msra.mxu0 0.0
    %2286 = vmatprep.subr.mxu0 0.0
    %2287 = vmatpush1.msra.mxu0 0.0
    %2288 = vmatprep.mubr.f32.mxu0 0.0
    %2289 = vmatmul.mubr.f32.gmra.mrb[0].mxu0 %v2068
    %v2290 = vpop.f32.mrb[0].mxu0
    %v2291 = vadd.f32 0.0, %v2290
    %v2292 = vpop.f32.mrb[0].mxu0
    %v2293 = vadd.f32 0.0, %v2292
    %2294 = vdwg.mxu0
    %v2295 = vadd.f32 %v2039, %v2149
    %v2296 = vadd.f32 %v2040, %v2151
    %v2297 = vadd.f32 %v2041, %v2220
    %v2298 = vadd.f32 %v2042, %v2222
    %v2299 = vadd.f32 %v2043, %v2291
    %v2300 = vadd.f32 %v2044, %v2293
    %2301 = vset.pattern.permute.xlu0 36
    %2302 = vperm.xlu0 %2301, %v19
    %v2303 = vpop.permute.xlu0 %2302
    %v2305 = vadd.f32 %v2295, %v2303
    %v2306 = vadd.f32 %v2296, %v2303
    %v2307 = vadd.f32 %v2297, %v2303
    %v2308 = vadd.f32 %v2298, %v2303
    %v2309 = vadd.f32 %v2299, %v2303
    %v2310 = vadd.f32 %v2300, %v2303
    %v2311 = vmax.f32 %v2305, 0.0
    %v2312 = vmax.f32 %v2306, 0.0
    %v2313 = vmax.f32 %v2307, 0.0
    %v2314 = vmax.f32 %v2308, 0.0
    %v2315 = vmax.f32 %v2309, 0.0
    %v2316 = vmax.f32 %v2310, 0.0
    %v2317 = vld [vmem:[%s2] sm:$0xff]
    %v2318 = vld [vmem:[%s2 + $0x8] sm:$0xf]
    %v2321 = vcombine.high %v2317, %v2317
    %v2323 = vunpack.c.l.s4 1983009808
    %v2324 = vunpack.c.0.s8 %v2323
    %v2325 = vlaneseq
    %v2326 = vshrl.u32 %v2325, 7
    %v2327 = vsub.s32 %v2324, %v2326
    %v2328 = vrot.slane %v2317, %v2327
    %v2330 = vunpack.c.l.s4 1983009808
    %v2331 = vunpack.c.0.s8 %v2330
    %v2332 = vlaneseq
    %v2333 = vshrl.u32 %v2332, 7
    %v2334 = vsub.s32 %v2331, %v2333
    %v2335 = vrot.slane %v2321, %v2334
    %v2336 = vcombine.high %v2328, %v2328
    %v2337 = vcombine.high %v2335, %v2335
    %v2339 = vunpack.c.l.s4 1983009808
    %v2340 = vunpack.c.0.s8 %v2339
    %v2341 = vlaneseq
    %v2342 = vshrl.u32 %v2341, 7
    %v2343 = vsub.s32 %v2340, %v2342
    %v2344 = vrot.slane %v2318, %v2343
    %v2345 = vcombine.high %v2344, %v2344
    %2352 = vmatprep.subr.mxu0 %v2312
    %2353 = vmatpush1.xpose.msra.mxu0 %v2311
    %2354 = vmatprep.subr.mxu0 0.0
    %2355 = vmatpush1.xpose.msra.mxu0 0.0
    %2356 = vmatprep.subr.mxu0 0.0
    %2357 = vmatpush1.xpose.msra.mxu0 0.0
    %2358 = vmatprep.subr.mxu0 0.0
    %2359 = vmatpush1.xpose.msra.mxu0 0.0
    %2360 = vmatprep.subr.mxu0 0.0
    %2361 = vmatpush1.xpose.msra.mxu0 0.0
    %2362 = vmatprep.subr.mxu0 0.0
    %2363 = vmatpush1.xpose.msra.mxu0 0.0
    %2364 = vmatprep.subr.mxu0 0.0
    %2365 = vmatpush1.xpose.msra.mxu0 0.0
    %2366 = vmatprep.subr.mxu0 0.0
    %2367 = vmatpush1.xpose.msra.mxu0 0.0
    %2368 = vmatprep.subr.mxu0 0.0
    %2369 = vmatpush1.xpose.msra.mxu0 0.0
    %2370 = vmatprep.subr.mxu0 0.0
    %2371 = vmatpush1.xpose.msra.mxu0 0.0
    %2372 = vmatprep.subr.mxu0 0.0
    %2373 = vmatpush1.xpose.msra.mxu0 0.0
    %2374 = vmatprep.subr.mxu0 0.0
    %2375 = vmatpush1.xpose.msra.mxu0 0.0
    %2376 = vmatprep.subr.mxu0 0.0
    %2377 = vmatpush1.xpose.msra.mxu0 0.0
    %2378 = vmatprep.subr.mxu0 0.0
    %2379 = vmatpush1.xpose.msra.mxu0 0.0
    %2380 = vmatprep.subr.mxu0 0.0
    %2381 = vmatpush1.xpose.msra.mxu0 0.0
    %2382 = vmatprep.subr.mxu0 0.0
    %2383 = vmatpush1.xpose.msra.mxu0 0.0
    %2384 = vmatprep.subr.mxu0 0.0
    %2385 = vmatpush1.xpose.msra.mxu0 0.0
    %2386 = vmatprep.subr.mxu0 0.0
    %2387 = vmatpush1.xpose.msra.mxu0 0.0
    %2388 = vmatprep.subr.mxu0 0.0
    %2389 = vmatpush1.xpose.msra.mxu0 0.0
    %2390 = vmatprep.subr.mxu0 0.0
    %2391 = vmatpush1.xpose.msra.mxu0 0.0
    %2392 = vmatprep.subr.mxu0 0.0
    %2393 = vmatpush1.xpose.msra.mxu0 0.0
    %2394 = vmatprep.subr.mxu0 0.0
    %2395 = vmatpush1.xpose.msra.mxu0 0.0
    %2396 = vmatprep.subr.mxu0 0.0
    %2397 = vmatpush1.xpose.msra.mxu0 0.0
    %2398 = vmatprep.subr.mxu0 0.0
    %2399 = vmatpush1.xpose.msra.mxu0 0.0
    %2400 = vmatprep.subr.mxu0 0.0
    %2401 = vmatpush1.xpose.msra.mxu0 0.0
    %2402 = vmatprep.subr.mxu0 0.0
    %2403 = vmatpush1.xpose.msra.mxu0 0.0
    %2404 = vmatprep.subr.mxu0 0.0
    %2405 = vmatpush1.xpose.msra.mxu0 0.0
    %2406 = vmatprep.subr.mxu0 0.0
    %2407 = vmatpush1.xpose.msra.mxu0 0.0
    %2408 = vmatprep.subr.mxu0 0.0
    %2409 = vmatpush1.xpose.msra.mxu0 0.0
    %2410 = vmatprep.subr.mxu0 0.0
    %2411 = vmatpush1.xpose.msra.mxu0 0.0
    %2412 = vmatprep.subr.mxu0 0.0
    %2413 = vmatpush1.xpose.msra.mxu0 0.0
    %2414 = vmatprep.subr.mxu0 0.0
    %2415 = vmatpush1.xpose.msra.mxu0 0.0
    %2416 = vmatprep.mubr.f32.mxu0 %v2336
    %2417 = vmatmul.mubr.f32.gmra.mrb[0].mxu0 %v2328
    %v2418 = vpop.f32.mrb[0].mxu0
    %v2419 = vadd.f32 0.0, %v2418
    %v2420 = vpop.f32.mrb[0].mxu0
    %2421 = vdwg.mxu0
    %2422 = vmatprep.subr.mxu0 %v2314
    %2423 = vmatpush1.xpose.msra.mxu0 %v2313
    %2424 = vmatprep.subr.mxu0 0.0
    %2425 = vmatpush1.xpose.msra.mxu0 0.0
    %2426 = vmatprep.subr.mxu0 0.0
    %2427 = vmatpush1.xpose.msra.mxu0 0.0
    %2428 = vmatprep.subr.mxu0 0.0
    %2429 = vmatpush1.xpose.msra.mxu0 0.0
    %2430 = vmatprep.subr.mxu0 0.0
    %2431 = vmatpush1.xpose.msra.mxu0 0.0
    %2432 = vmatprep.subr.mxu0 0.0
    %2433 = vmatpush1.xpose.msra.mxu0 0.0
    %2434 = vmatprep.subr.mxu0 0.0
    %2435 = vmatpush1.xpose.msra.mxu0 0.0
    %2436 = vmatprep.subr.mxu0 0.0
    %2437 = vmatpush1.xpose.msra.mxu0 0.0
    %2438 = vmatprep.subr.mxu0 0.0
    %2439 = vmatpush1.xpose.msra.mxu0 0.0
    %2440 = vmatprep.subr.mxu0 0.0
    %2441 = vmatpush1.xpose.msra.mxu0 0.0
    %2442 = vmatprep.subr.mxu0 0.0
    %2443 = vmatpush1.xpose.msra.mxu0 0.0
    %2444 = vmatprep.subr.mxu0 0.0
    %2445 = vmatpush1.xpose.msra.mxu0 0.0
    %2446 = vmatprep.subr.mxu0 0.0
    %2447 = vmatpush1.xpose.msra.mxu0 0.0
    %2448 = vmatprep.subr.mxu0 0.0
    %2449 = vmatpush1.xpose.msra.mxu0 0.0
    %2450 = vmatprep.subr.mxu0 0.0
    %2451 = vmatpush1.xpose.msra.mxu0 0.0
    %2452 = vmatprep.subr.mxu0 0.0
    %2453 = vmatpush1.xpose.msra.mxu0 0.0
    %2454 = vmatprep.subr.mxu0 0.0
    %2455 = vmatpush1.xpose.msra.mxu0 0.0
    %2456 = vmatprep.subr.mxu0 0.0
    %2457 = vmatpush1.xpose.msra.mxu0 0.0
    %2458 = vmatprep.subr.mxu0 0.0
    %2459 = vmatpush1.xpose.msra.mxu0 0.0
    %2460 = vmatprep.subr.mxu0 0.0
    %2461 = vmatpush1.xpose.msra.mxu0 0.0
    %2462 = vmatprep.subr.mxu0 0.0
    %2463 = vmatpush1.xpose.msra.mxu0 0.0
    %2464 = vmatprep.subr.mxu0 0.0
    %2465 = vmatpush1.xpose.msra.mxu0 0.0
    %2466 = vmatprep.subr.mxu0 0.0
    %2467 = vmatpush1.xpose.msra.mxu0 0.0
    %2468 = vmatprep.subr.mxu0 0.0
    %2469 = vmatpush1.xpose.msra.mxu0 0.0
    %2470 = vmatprep.subr.mxu0 0.0
    %2471 = vmatpush1.xpose.msra.mxu0 0.0
    %2472 = vmatprep.subr.mxu0 0.0
    %2473 = vmatpush1.xpose.msra.mxu0 0.0
    %2474 = vmatprep.subr.mxu0 0.0
    %2475 = vmatpush1.xpose.msra.mxu0 0.0
    %2476 = vmatprep.subr.mxu0 0.0
    %2477 = vmatpush1.xpose.msra.mxu0 0.0
    %2478 = vmatprep.subr.mxu0 0.0
    %2479 = vmatpush1.xpose.msra.mxu0 0.0
    %2480 = vmatprep.subr.mxu0 0.0
    %2481 = vmatpush1.xpose.msra.mxu0 0.0
    %2482 = vmatprep.subr.mxu0 0.0
    %2483 = vmatpush1.xpose.msra.mxu0 0.0
    %2484 = vmatprep.subr.mxu0 0.0
    %2485 = vmatpush1.xpose.msra.mxu0 0.0
    %2486 = vmatprep.mubr.f32.mxu0 %v2337
    %2487 = vmatmul.mubr.f32.gmra.mrb[0].mxu0 %v2335
    %v2488 = vpop.f32.mrb[0].mxu0
    %v2489 = vadd.f32 %v2419, %v2488
    %v2490 = vpop.f32.mrb[0].mxu0
    %2491 = vdwg.mxu0
    %2492 = vmatprep.subr.mxu0 %v2316
    %2493 = vmatpush1.xpose.msra.mxu0 %v2315
    %2494 = vmatprep.subr.mxu0 0.0
    %2495 = vmatpush1.xpose.msra.mxu0 0.0
    %2496 = vmatprep.subr.mxu0 0.0
    %2497 = vmatpush1.xpose.msra.mxu0 0.0
    %2498 = vmatprep.subr.mxu0 0.0
    %2499 = vmatpush1.xpose.msra.mxu0 0.0
    %2500 = vmatprep.subr.mxu0 0.0
    %2501 = vmatpush1.xpose.msra.mxu0 0.0
    %2502 = vmatprep.subr.mxu0 0.0
    %2503 = vmatpush1.xpose.msra.mxu0 0.0
    %2504 = vmatprep.subr.mxu0 0.0
    %2505 = vmatpush1.xpose.msra.mxu0 0.0
    %2506 = vmatprep.subr.mxu0 0.0
    %2507 = vmatpush1.xpose.msra.mxu0 0.0
    %2508 = vmatprep.subr.mxu0 0.0
    %2509 = vmatpush1.xpose.msra.mxu0 0.0
    %2510 = vmatprep.subr.mxu0 0.0
    %2511 = vmatpush1.xpose.msra.mxu0 0.0
    %2512 = vmatprep.subr.mxu0 0.0
    %2513 = vmatpush1.xpose.msra.mxu0 0.0
    %2514 = vmatprep.subr.mxu0 0.0
    %2515 = vmatpush1.xpose.msra.mxu0 0.0
    %2516 = vmatprep.subr.mxu0 0.0
    %2517 = vmatpush1.xpose.msra.mxu0 0.0
    %2518 = vmatprep.subr.mxu0 0.0
    %2519 = vmatpush1.xpose.msra.mxu0 0.0
    %2520 = vmatprep.subr.mxu0 0.0
    %2521 = vmatpush1.xpose.msra.mxu0 0.0
    %2522 = vmatprep.subr.mxu0 0.0
    %2523 = vmatpush1.xpose.msra.mxu0 0.0
    %2524 = vmatprep.subr.mxu0 0.0
    %2525 = vmatpush1.xpose.msra.mxu0 0.0
    %2526 = vmatprep.subr.mxu0 0.0
    %2527 = vmatpush1.xpose.msra.mxu0 0.0
    %2528 = vmatprep.subr.mxu0 0.0
    %2529 = vmatpush1.xpose.msra.mxu0 0.0
    %2530 = vmatprep.subr.mxu0 0.0
    %2531 = vmatpush1.xpose.msra.mxu0 0.0
    %2532 = vmatprep.subr.mxu0 0.0
    %2533 = vmatpush1.xpose.msra.mxu0 0.0
    %2534 = vmatprep.subr.mxu0 0.0
    %2535 = vmatpush1.xpose.msra.mxu0 0.0
    %2536 = vmatprep.subr.mxu0 0.0
    %2537 = vmatpush1.xpose.msra.mxu0 0.0
    %2538 = vmatprep.subr.mxu0 0.0
    %2539 = vmatpush1.xpose.msra.mxu0 0.0
    %2540 = vmatprep.subr.mxu0 0.0
    %2541 = vmatpush1.xpose.msra.mxu0 0.0
    %2542 = vmatprep.subr.mxu0 0.0
    %2543 = vmatpush1.xpose.msra.mxu0 0.0
    %2544 = vmatprep.subr.mxu0 0.0
    %2545 = vmatpush1.xpose.msra.mxu0 0.0
    %2546 = vmatprep.subr.mxu0 0.0
    %2547 = vmatpush1.xpose.msra.mxu0 0.0
    %2548 = vmatprep.subr.mxu0 0.0
    %2549 = vmatpush1.xpose.msra.mxu0 0.0
    %2550 = vmatprep.subr.mxu0 0.0
    %2551 = vmatpush1.xpose.msra.mxu0 0.0
    %2552 = vmatprep.subr.mxu0 0.0
    %2553 = vmatpush1.xpose.msra.mxu0 0.0
    %2554 = vmatprep.subr.mxu0 0.0
    %2555 = vmatpush1.xpose.msra.mxu0 0.0
    %2556 = vmatprep.mubr.f32.mxu0 %v2345
    %2557 = vmatmul.mubr.f32.gmra.mrb[0].mxu0 %v2344
    %v2558 = vpop.f32.mrb[0].mxu0
    %v2559 = vadd.f32 %v2489, %v2558
    %v2560 = vpop.f32.mrb[0].mxu0
    %2561 = vdwg.mxu0
    %v2562 = vlaneseq
    %v2563 = vshrl.u32 %v2562, 7
    %v2564 = vsub.s32 0, %v2563
    %v2565 = vrot.slane %v21, %v2564
    %vm2566 = vcmask 64512
    %v2568 = vsel %vm2566, %v2559, 0
    %2570 = vmatprep.subr.mxu0 0.0
    %2571 = vmatpush1.msra.mxu0 %v20
    %2572 = vmatprep.subr.mxu0 0.0
    %2573 = vmatpush1.msra.mxu0 0.0
    %2574 = vmatprep.subr.mxu0 0.0
    %2575 = vmatpush1.msra.mxu0 0.0
    %2576 = vmatprep.subr.mxu0 0.0
    %2577 = vmatpush1.msra.mxu0 0.0
    %2578 = vmatprep.subr.mxu0 0.0
    %2579 = vmatpush1.msra.mxu0 0.0
    %2580 = vmatprep.subr.mxu0 0.0
    %2581 = vmatpush1.msra.mxu0 0.0
    %2582 = vmatprep.subr.mxu0 0.0
    %2583 = vmatpush1.msra.mxu0 0.0
    %2584 = vmatprep.subr.mxu0 0.0
    %2585 = vmatpush1.msra.mxu0 0.0
    %2586 = vmatprep.subr.mxu0 0.0
    %2587 = vmatpush1.msra.mxu0 0.0
    %2588 = vmatprep.subr.mxu0 0.0
    %2589 = vmatpush1.msra.mxu0 0.0
    %2590 = vmatprep.subr.mxu0 0.0
    %2591 = vmatpush1.msra.mxu0 0.0
    %2592 = vmatprep.subr.mxu0 0.0
    %2593 = vmatpush1.msra.mxu0 0.0
    %2594 = vmatprep.subr.mxu0 0.0
    %2595 = vmatpush1.msra.mxu0 0.0
    %2596 = vmatprep.subr.mxu0 0.0
    %2597 = vmatpush1.msra.mxu0 0.0
    %2598 = vmatprep.subr.mxu0 0.0
    %2599 = vmatpush1.msra.mxu0 0.0
    %2600 = vmatprep.subr.mxu0 0.0
    %2601 = vmatpush1.msra.mxu0 0.0
    %2602 = vmatprep.subr.mxu0 0.0
    %2603 = vmatpush1.msra.mxu0 0.0
    %2604 = vmatprep.subr.mxu0 0.0
    %2605 = vmatpush1.msra.mxu0 0.0
    %2606 = vmatprep.subr.mxu0 0.0
    %2607 = vmatpush1.msra.mxu0 0.0
    %2608 = vmatprep.subr.mxu0 0.0
    %2609 = vmatpush1.msra.mxu0 0.0
    %2610 = vmatprep.subr.mxu0 0.0
    %2611 = vmatpush1.msra.mxu0 0.0
    %2612 = vmatprep.subr.mxu0 0.0
    %2613 = vmatpush1.msra.mxu0 0.0
    %2614 = vmatprep.subr.mxu0 0.0
    %2615 = vmatpush1.msra.mxu0 0.0
    %2616 = vmatprep.subr.mxu0 0.0
    %2617 = vmatpush1.msra.mxu0 0.0
    %2618 = vmatprep.subr.mxu0 0.0
    %2619 = vmatpush1.msra.mxu0 0.0
    %2620 = vmatprep.subr.mxu0 0.0
    %2621 = vmatpush1.msra.mxu0 0.0
    %2622 = vmatprep.subr.mxu0 0.0
    %2623 = vmatpush1.msra.mxu0 0.0
    %2624 = vmatprep.subr.mxu0 0.0
    %2625 = vmatpush1.msra.mxu0 0.0
    %2626 = vmatprep.subr.mxu0 0.0
    %2627 = vmatpush1.msra.mxu0 0.0
    %2628 = vmatprep.subr.mxu0 0.0
    %2629 = vmatpush1.msra.mxu0 0.0
    %2630 = vmatprep.subr.mxu0 0.0
    %2631 = vmatpush1.msra.mxu0 0.0
    %2632 = vmatprep.subr.mxu0 0.0
    %2633 = vmatpush1.msra.mxu0 0.0
    %2634 = vmatprep.mubr.f32.mxu0 0.0
    %2635 = vmatmul.mubr.f32.gmra.mrb[0].mxu0 %v2568
    %v2636 = vpop.f32.mrb[0].mxu0
    %v2637 = vadd.f32 %v2565, %v2636
    %v2638 = vpop.f32.mrb[0].mxu0
    %2639 = vdwg.mxu0
    %2640 = vst [vmem:[#allocation2] sm:$0x3] %v2637
    // Predicated region
    $region14: #{full_model.1} parent=1 // pred_check
      _
    $region15: #{full_model.1} parent=1 // pred_check_branch
      %2642 = sbr.rel (0) target = $region17
    $region16: #{full_model.1} parent=1 // pred_region
      %s2644 = ssub.s32 32, 32
      %2645 = vsyncadd [#allocation3], %s2644
      %s2647 = sshll.u32 [#allocation2], 4
      %s2648 = int_to_ptr.vmem [resolvable:$true] %s2647
      %2650 = dma.vmem_to_hbm [thread:$0]  %s2648, 32, %s3, [#allocation3]
    $region17: #{full_model.1} parent=1 // pred_fallthru
      _
    // Predicated region
    $region18: #{full_model.1} parent=1 // pred_check
      _
    $region19: #{full_model.1} parent=1 // pred_check_branch
      %2652 = sbr.rel (0) target = $region21
    $region20: #{full_model.1} parent=1 // pred_region
      %2653 = dma.done [#allocation3], 32
    $region21: #{full_model.1} parent=1 // pred_fallthru
      _
    %2654 = vsyncpa [#allocation3], 1

</llo_original>
